<compile_context>
chip_gen: v5e
topology: v5e:2x2
jax: 0.10.0
libtpu: 0.0.40
codegen_flags: <defaults>
</compile_context>

<pallas_src>
import functools

import jax
import jax.numpy as jnp
from jax.experimental import pallas as pl
from jax.experimental.pallas import tpu as pltpu

K = 2                           # propagation hops (module default)
LANES = 128                     # lane width: pad F_out to a multiple of this
VMEM_LIMIT = 32 * 1024 * 1024   # safe on v5e/v6e (128 MiB phys) and v7x (64 MiB phys)


def _round_up(x, m):
    return (x + m - 1) // m * m


def _pick_tile(n, preferred, multiple):
    """Largest divisor of n that is <= preferred and a multiple of `multiple`."""
    if n <= preferred:
        return n
    t = (preferred // multiple) * multiple
    while t >= multiple:
        if n % t == 0:
            return t
        t -= multiple
    return n


def _proj_kernel(x_ref, w_ref, o_ref):
    # u2 row-tile = x_tile @ W2^T   (bf16 operands, f32 MXU accumulation)
    o_ref[...] = jnp.dot(
        x_ref[...], w_ref[...], preferred_element_type=jnp.float32
    ).astype(o_ref.dtype)


def _prop_kernel(adj_ref, c_ref, x_ref, w_ref, b_ref, o_ref, acc_ref):
    """One row tile of  out = x @ w + b + adj @ c;  reduction tiled on grid axis 1."""
    k = pl.program_id(1)

    @pl.when(k == 0)
    def _init():
        # Projection term + bias, added exactly once per row tile.
        acc_ref[...] = (
            jnp.dot(x_ref[...], w_ref[...], preferred_element_type=jnp.float32)
            + b_ref[...]
        )

    acc_ref[...] += jnp.dot(
        adj_ref[...], c_ref[...], preferred_element_type=jnp.float32
    )

    @pl.when(k == pl.num_programs(1) - 1)
    def _finalize():
        o_ref[...] = acc_ref[...].astype(o_ref.dtype)


@functools.partial(jax.jit, static_argnames=("block_m", "block_k"))
def tagraph_forward(x, adj, w, b, *, block_m=256, block_k=512):
    """x: (N, F_in), adj: (N, N) dense (spmm path), w: (F_out, 3*F_in), b: (F_out,)."""
    n, f_in = x.shape
    f_out = w.shape[0]
    assert adj.shape == (n, n)
    assert w.shape == (f_out, (K + 1) * f_in)

    f_pad = _round_up(f_out, LANES)
    tm = _pick_tile(n, block_m, 16)    # row tile (bf16 sublane-friendly)
    tk = _pick_tile(n, block_k, 128)   # reduction tile (lane-aligned)

    # Transposed, zero-padded (lane-dense) weight slices, bf16 for the MXU.
    wT = jnp.zeros(((K + 1) * f_in, f_pad), jnp.float32).at[:, :f_out].set(w.T)
    w0 = wT[0 * f_in:1 * f_in].astype(jnp.bfloat16)
    w1 = wT[1 * f_in:2 * f_in].astype(jnp.bfloat16)
    w2 = wT[2 * f_in:3 * f_in].astype(jnp.bfloat16)
    b_pad = jnp.zeros((1, f_pad), jnp.float32).at[0, :f_out].set(b)
    zero_b = jnp.zeros((1, f_pad), jnp.float32)

    x_bf = x.astype(jnp.bfloat16)
    adj_bf = adj.astype(jnp.bfloat16)   # halves HBM traffic on the dominant operand

    # ---- small projection kernel: u2 = x @ W2^T  (kept on the MXU / in Pallas) ----
    u2 = pl.pallas_call(
        _proj_kernel,
        out_shape=jax.ShapeDtypeStruct((n, f_pad), jnp.bfloat16),
        grid_spec=pltpu.PrefetchScalarGridSpec(
            num_scalar_prefetch=0,
            grid=(n // tm,),
            in_specs=[
                pl.BlockSpec((tm, f_in), lambda i: (i, 0)),
                pl.BlockSpec((f_in, f_pad), lambda i: (0, 0)),
            ],
            out_specs=pl.BlockSpec((tm, f_pad), lambda i: (i, 0)),
        ),
        compiler_params=pltpu.CompilerParams(
            dimension_semantics=("parallel",),
            vmem_limit_bytes=VMEM_LIMIT,
        ),
    )(x_bf, w2)

    # ---- main propagation kernel:  out = x @ w + b + adj @ c  (tiled) ----
    def propagate(c, w_slice, bias, out_dtype):
        out_itemsize = jnp.dtype(out_dtype).itemsize
        flops = 2 * n * n * f_pad + 2 * n * f_in * f_pad
        bytes_accessed = (
            n * n * 2            # adj (bf16)
            + n * f_pad * 2      # c (bf16)
            + n * f_in * 2       # x (bf16)
            + f_in * f_pad * 2   # weight slice (bf16)
            + f_pad * 4          # bias (f32)
            + n * f_pad * out_itemsize
        )
        return pl.pallas_call(
            _prop_kernel,
            out_shape=jax.ShapeDtypeStruct((n, f_pad), out_dtype),
            grid_spec=pltpu.PrefetchScalarGridSpec(
                num_scalar_prefetch=0,
                grid=(n // tm, n // tk),
                in_specs=[
                    pl.BlockSpec((tm, tk), lambda i, k: (i, k)),       # adj tile
                    pl.BlockSpec((tk, f_pad), lambda i, k: (k, 0)),    # c tile (u2 / z)
                    pl.BlockSpec((tm, f_in), lambda i, k: (i, 0)),     # x row tile
                    pl.BlockSpec((f_in, f_pad), lambda i, k: (0, 0)),  # weight (resident)
                    pl.BlockSpec((1, f_pad), lambda i, k: (0, 0)),     # bias (resident)
                ],
                out_specs=pl.BlockSpec((tm, f_pad), lambda i, k: (i, 0)),
                scratch_shapes=[pltpu.VMEM((tm, f_pad), jnp.float32)],
            ),
            compiler_params=pltpu.CompilerParams(
                dimension_semantics=("parallel", "arbitrary"),
                vmem_limit_bytes=VMEM_LIMIT,
            ),
            cost_estimate=pl.CostEstimate(
                flops=flops, transcendentals=0, bytes_accessed=bytes_accessed
            ),
        )(adj_bf, c, x_bf, w_slice, bias)

    # pass 1:  z   = x @ W1^T     + adj @ u2
    z = propagate(u2, w1, zero_b, jnp.bfloat16)
    # pass 2:  out = x @ W0^T + b + adj @ z
    out_pad = propagate(z, w0, b_pad, x.dtype)

    # Slice off the lane padding outside the kernel.
    return out_pad[:, :f_out]


def tagraph_reference(x, adj, w, b):
    fstack = [x]
    for _ in range(K):
        fstack.append(adj @ fstack[-1])
    cat = jnp.concatenate(fstack, axis=-1)
    return cat @ w.T + b


if __name__ == "__main__":
    N, F_IN, F_OUT = 256, 32, 64

    key = jax.random.PRNGKey(0)
    kx, kadj, kw, kb = jax.random.split(key, 4)

    x = jax.random.normal(kx, (N, F_IN), dtype=jnp.float32)

    # Dense row-normalized "adjacency" standing in for the sparse torch.spmm operand.
    a = (jax.random.uniform(kadj, (N, N)) < 0.1).astype(jnp.float32)
    a = a + jnp.eye(N, dtype=jnp.float32)
    adj = a / jnp.sum(a, axis=-1, keepdims=True)

    # nn.Linear(3*F_IN, F_OUT) with xavier_normal_(gain=calculate_gain('relu')).
    fan_in = (K + 1) * F_IN
    gain = jnp.sqrt(2.0)
    std = gain * jnp.sqrt(2.0 / (fan_in + F_OUT))
    w = std * jax.random.normal(kw, (F_OUT, fan_in), dtype=jnp.float32)
    bound = 1.0 / jnp.sqrt(fan_in)
    b = jax.random.uniform(kb, (F_OUT,), minval=-bound, maxval=bound,
                           dtype=jnp.float32)

    # Small blocks so the demo exercises a multi-step (2 x 2) grid.
    out = jax.block_until_ready(
        tagraph_forward(x, adj, w, b, block_m=128, block_k=128))
    ref = jax.block_until_ready(tagraph_reference(x, adj, w, b))

    assert out.shape == (N, F_OUT)
    # bf16 operands (f32 accumulation) -> compare to the f32 reference at
    # bf16-level tolerance.
    assert jnp.allclose(out, ref, atol=5e-2, rtol=5e-2), float(
        jnp.max(jnp.abs(out - ref)))

    # TODO(synk): batched 3-D torch.bmm branch and training-time extras
    # (BatchNorm1d, dropout, activation) are disabled by module defaults and
    # not lowered here.

    print("KERNEL_OK")
</pallas_src>

<mosaic_0001>
module attributes {stable_mosaic.version = 11 : i64} {
  func.func @_proj_kernel(%arg0: i32, %arg1: memref<128x32xbf16, #tpu.memory_space<vmem>>, %arg2: memref<32x128xbf16, #tpu.memory_space<vmem>>, %arg3: memref<128x128xbf16, #tpu.memory_space<vmem>>) attributes {dimension_semantics = [#tpu.dimension_semantics<parallel>], iteration_bounds = array<i64: 2>, scalar_prefetch = 0 : i64, scratch_operands = 0 : i64, tpu.core_type = #tpu.core_type<tc>, window_params = [{transform_indices = @transform_0, window_bounds = array<i64: 128, 32>}, {pipeline_mode = #tpu.pipeline_mode<synchronous>, transform_indices = @transform_1, window_bounds = array<i64: 32, 128>}, {transform_indices = @transform_2, window_bounds = array<i64: 128, 128>}]} {
    %c0 = arith.constant 0 : index
    %c0_0 = arith.constant 0 : index
    %0 = vector.load %arg1[%c0, %c0_0] : memref<128x32xbf16, #tpu.memory_space<vmem>>, vector<128x32xbf16>
    %c0_1 = arith.constant 0 : index
    %c0_2 = arith.constant 0 : index
    %1 = vector.load %arg2[%c0_1, %c0_2] : memref<32x128xbf16, #tpu.memory_space<vmem>>, vector<32x128xbf16>
    %cst = arith.constant dense<0.000000e+00> : vector<128x128xf32>
    %2 = tpu.matmul %0, %1, %cst {dimension_numbers = #tpu.dot_dimension_numbers<[1], [0], [0], [1], [0, 0, 1, 1], [], []>} : vector<128x32xbf16>, vector<32x128xbf16>, vector<128x128xf32> -> vector<128x128xf32>
    %3 = arith.truncf %2 : vector<128x128xf32> to vector<128x128xbf16>
    %c0_3 = arith.constant 0 : index
    %c0_4 = arith.constant 0 : index
    %4 = vector.load %arg3[%c0_3, %c0_4] : memref<128x128xbf16, #tpu.memory_space<vmem>>, vector<128x128xbf16>
    tpu.vector_store %arg3[%c0_3, %c0_4], %3 {strides = array<i32>} : memref<128x128xbf16, #tpu.memory_space<vmem>>, vector<128x128xbf16>,
    return
  }
  func.func @transform_0(%arg0: i32) -> (i32, i32) {
    %c0_i32 = arith.constant 0 : i32
    %c0_i32_0 = arith.constant 0 : i32
    return %arg0, %c0_i32 : i32, i32
  }
  func.func @transform_1(%arg0: i32) -> (i32, i32) {
    %c0_i32 = arith.constant 0 : i32
    %c0_i32_0 = arith.constant 0 : i32
    %c0_i32_1 = arith.constant 0 : i32
    return %c0_i32, %c0_i32_0 : i32, i32
  }
  func.func @transform_2(%arg0: i32) -> (i32, i32) {
    %c0_i32 = arith.constant 0 : i32
    %c0_i32_0 = arith.constant 0 : i32
    return %arg0, %c0_i32 : i32, i32
  }
}

module attributes {stable_mosaic.version = 11 : i64} {
  func.func @_prop_kernel(%arg0: i32, %arg1: i32, %arg2: memref<128x128xbf16, #tpu.memory_space<vmem>>, %arg3: memref<128x128xbf16, #tpu.memory_space<vmem>>, %arg4: memref<128x32xbf16, #tpu.memory_space<vmem>>, %arg5: memref<32x128xbf16, #tpu.memory_space<vmem>>, %arg6: memref<1x128xf32, #tpu.memory_space<vmem>>, %arg7: memref<128x128xf32, #tpu.memory_space<vmem>>, %arg8: memref<128x128xf32, #tpu.memory_space<vmem>>) attributes {dimension_semantics = [#tpu.dimension_semantics<parallel>, #tpu.dimension_semantics<arbitrary>], iteration_bounds = array<i64: 2, 2>, scalar_prefetch = 0 : i64, scratch_operands = 1 : i64, tpu.core_type = #tpu.core_type<tc>, window_params = [{transform_indices = @transform_0, window_bounds = array<i64: 128, 128>}, {transform_indices = @transform_1, window_bounds = array<i64: 128, 128>}, {transform_indices = @transform_2, window_bounds = array<i64: 128, 32>}, {pipeline_mode = #tpu.pipeline_mode<synchronous>, transform_indices = @transform_3, window_bounds = array<i64: 32, 128>}, {pipeline_mode = #tpu.pipeline_mode<synchronous>, transform_indices = @transform_4, window_bounds = array<i64: 1, 128>}, {transform_indices = @transform_5, window_bounds = array<i64: 128, 128>}]} {
    %c0_i32 = arith.constant 0 : i32
    %0 = arith.cmpi eq, %arg1, %c0_i32 : i32
    %1 = arith.extui %0 : i1 to i32
    %c0_i32_0 = arith.constant 0 : i32
    %2 = arith.cmpi ne, %1, %c0_i32_0 : i32
    scf.if %2 {
      %c0_9 = arith.constant 0 : index
      %c0_10 = arith.constant 0 : index
      %12 = vector.load %arg4[%c0_9, %c0_10] : memref<128x32xbf16, #tpu.memory_space<vmem>>, vector<128x32xbf16>
      %c0_11 = arith.constant 0 : index
      %c0_12 = arith.constant 0 : index
      %13 = vector.load %arg5[%c0_11, %c0_12] : memref<32x128xbf16, #tpu.memory_space<vmem>>, vector<32x128xbf16>
      %cst_13 = arith.constant dense<0.000000e+00> : vector<128x128xf32>
      %14 = tpu.matmul %12, %13, %cst_13 {dimension_numbers = #tpu.dot_dimension_numbers<[1], [0], [0], [1], [0, 0, 1, 1], [], []>} : vector<128x32xbf16>, vector<32x128xbf16>, vector<128x128xf32> -> vector<128x128xf32>
      %c0_14 = arith.constant 0 : index
      %c0_15 = arith.constant 0 : index
      %15 = vector.load %arg6[%c0_14, %c0_15] : memref<1x128xf32, #tpu.memory_space<vmem>>, vector<1x128xf32>
      %16 = vector.broadcast %15 : vector<1x128xf32> to vector<128x128xf32>
      %17 = arith.addf %14, %16 : vector<128x128xf32>
      %c0_16 = arith.constant 0 : index
      %c0_17 = arith.constant 0 : index
      %18 = vector.load %arg8[%c0_16, %c0_17] : memref<128x128xf32, #tpu.memory_space<vmem>>, vector<128x128xf32>
      tpu.vector_store %arg8[%c0_16, %c0_17], %17 {strides = array<i32>} : memref<128x128xf32, #tpu.memory_space<vmem>>, vector<128x128xf32>,
    } else {
    }
    %c0 = arith.constant 0 : index
    %c0_1 = arith.constant 0 : index
    %3 = vector.load %arg8[%c0, %c0_1] : memref<128x128xf32, #tpu.memory_space<vmem>>, vector<128x128xf32>
    %c0_2 = arith.constant 0 : index
    %c0_3 = arith.constant 0 : index
    %4 = vector.load %arg2[%c0_2, %c0_3] : memref<128x128xbf16, #tpu.memory_space<vmem>>, vector<128x128xbf16>
    %c0_4 = arith.constant 0 : index
    %c0_5 = arith.constant 0 : index
    %5 = vector.load %arg3[%c0_4, %c0_5] : memref<128x128xbf16, #tpu.memory_space<vmem>>, vector<128x128xbf16>
    %cst = arith.constant dense<0.000000e+00> : vector<128x128xf32>
    %6 = tpu.matmul %4, %5, %cst {dimension_numbers = #tpu.dot_dimension_numbers<[1], [0], [0], [1], [0, 0, 1, 1], [], []>} : vector<128x128xbf16>, vector<128x128xbf16>, vector<128x128xf32> -> vector<128x128xf32>
    %7 = arith.addf %3, %6 : vector<128x128xf32>
    %c0_6 = arith.constant 0 : index
    %c0_7 = arith.constant 0 : index
    %8 = vector.load %arg8[%c0_6, %c0_7] : memref<128x128xf32, #tpu.memory_space<vmem>>, vector<128x128xf32>
    tpu.vector_store %arg8[%c0_6, %c0_7], %7 {strides = array<i32>} : memref<128x128xf32, #tpu.memory_space<vmem>>, vector<128x128xf32>,
    %c1_i32 = arith.constant 1 : i32
    %9 = arith.cmpi eq, %arg1, %c1_i32 : i32
    %10 = arith.extui %9 : i1 to i32
    %c0_i32_8 = arith.constant 0 : i32
    %11 = arith.cmpi ne, %10, %c0_i32_8 : i32
    scf.if %11 {
      %c0_9 = arith.constant 0 : index
      %c0_10 = arith.constant 0 : index
      %12 = vector.load %arg8[%c0_9, %c0_10] : memref<128x128xf32, #tpu.memory_space<vmem>>, vector<128x128xf32>
      %c0_11 = arith.constant 0 : index
      %c0_12 = arith.constant 0 : index
      %13 = vector.load %arg7[%c0_11, %c0_12] : memref<128x128xf32, #tpu.memory_space<vmem>>, vector<128x128xf32>
      tpu.vector_store %arg7[%c0_11, %c0_12], %12 {strides = array<i32>} : memref<128x128xf32, #tpu.memory_space<vmem>>, vector<128x128xf32>,
    } else {
    }
    return
  }
  func.func @transform_0(%arg0: i32, %arg1: i32) -> (i32, i32) {
    %c0_i32 = arith.constant 0 : i32
    return %arg0, %arg1 : i32, i32
  }
  func.func @transform_1(%arg0: i32, %arg1: i32) -> (i32, i32) {
    %c0_i32 = arith.constant 0 : i32
    %c0_i32_0 = arith.constant 0 : i32
    return %arg1, %c0_i32 : i32, i32
  }
  func.func @transform_2(%arg0: i32, %arg1: i32) -> (i32, i32) {
    %c0_i32 = arith.constant 0 : i32
    %c0_i32_0 = arith.constant 0 : i32
    return %arg0, %c0_i32 : i32, i32
  }
  func.func @transform_3(%arg0: i32, %arg1: i32) -> (i32, i32) {
    %c0_i32 = arith.constant 0 : i32
    %c0_i32_0 = arith.constant 0 : i32
    %c0_i32_1 = arith.constant 0 : i32
    return %c0_i32, %c0_i32_0 : i32, i32
  }
  func.func @transform_4(%arg0: i32, %arg1: i32) -> (i32, i32) {
    %c0_i32 = arith.constant 0 : i32
    %c0_i32_0 = arith.constant 0 : i32
    %c0_i32_1 = arith.constant 0 : i32
    return %c0_i32, %c0_i32_0 : i32, i32
  }
  func.func @transform_5(%arg0: i32, %arg1: i32) -> (i32, i32) {
    %c0_i32 = arith.constant 0 : i32
    %c0_i32_0 = arith.constant 0 : i32
    return %arg0, %c0_i32 : i32, i32
  }
}

module attributes {stable_mosaic.version = 11 : i64} {
  func.func @_prop_kernel(%arg0: i32, %arg1: i32, %arg2: memref<128x128xbf16, #tpu.memory_space<vmem>>, %arg3: memref<128x128xbf16, #tpu.memory_space<vmem>>, %arg4: memref<128x32xbf16, #tpu.memory_space<vmem>>, %arg5: memref<32x128xbf16, #tpu.memory_space<vmem>>, %arg6: memref<1x128xf32, #tpu.memory_space<vmem>>, %arg7: memref<128x128xbf16, #tpu.memory_space<vmem>>, %arg8: memref<128x128xf32, #tpu.memory_space<vmem>>) attributes {dimension_semantics = [#tpu.dimension_semantics<parallel>, #tpu.dimension_semantics<arbitrary>], iteration_bounds = array<i64: 2, 2>, scalar_prefetch = 0 : i64, scratch_operands = 1 : i64, tpu.core_type = #tpu.core_type<tc>, window_params = [{transform_indices = @transform_0, window_bounds = array<i64: 128, 128>}, {transform_indices = @transform_1, window_bounds = array<i64: 128, 128>}, {transform_indices = @transform_2, window_bounds = array<i64: 128, 32>}, {pipeline_mode = #tpu.pipeline_mode<synchronous>, transform_indices = @transform_3, window_bounds = array<i64: 32, 128>}, {pipeline_mode = #tpu.pipeline_mode<synchronous>, transform_indices = @transform_4, window_bounds = array<i64: 1, 128>}, {transform_indices = @transform_5, window_bounds = array<i64: 128, 128>}]} {
    %c0_i32 = arith.constant 0 : i32
    %0 = arith.cmpi eq, %arg1, %c0_i32 : i32
    %1 = arith.extui %0 : i1 to i32
    %c0_i32_0 = arith.constant 0 : i32
    %2 = arith.cmpi ne, %1, %c0_i32_0 : i32
    scf.if %2 {
      %c0_9 = arith.constant 0 : index
      %c0_10 = arith.constant 0 : index
      %12 = vector.load %arg4[%c0_9, %c0_10] : memref<128x32xbf16, #tpu.memory_space<vmem>>, vector<128x32xbf16>
      %c0_11 = arith.constant 0 : index
      %c0_12 = arith.constant 0 : index
      %13 = vector.load %arg5[%c0_11, %c0_12] : memref<32x128xbf16, #tpu.memory_space<vmem>>, vector<32x128xbf16>
      %cst_13 = arith.constant dense<0.000000e+00> : vector<128x128xf32>
      %14 = tpu.matmul %12, %13, %cst_13 {dimension_numbers = #tpu.dot_dimension_numbers<[1], [0], [0], [1], [0, 0, 1, 1], [], []>} : vector<128x32xbf16>, vector<32x128xbf16>, vector<128x128xf32> -> vector<128x128xf32>
      %c0_14 = arith.constant 0 : index
      %c0_15 = arith.constant 0 : index
      %15 = vector.load %arg6[%c0_14, %c0_15] : memref<1x128xf32, #tpu.memory_space<vmem>>, vector<1x128xf32>
      %16 = vector.broadcast %15 : vector<1x128xf32> to vector<128x128xf32>
      %17 = arith.addf %14, %16 : vector<128x128xf32>
      %c0_16 = arith.constant 0 : index
      %c0_17 = arith.constant 0 : index
      %18 = vector.load %arg8[%c0_16, %c0_17] : memref<128x128xf32, #tpu.memory_space<vmem>>, vector<128x128xf32>
      tpu.vector_store %arg8[%c0_16, %c0_17], %17 {strides = array<i32>} : memref<128x128xf32, #tpu.memory_space<vmem>>, vector<128x128xf32>,
    } else {
    }
    %c0 = arith.constant 0 : index
    %c0_1 = arith.constant 0 : index
    %3 = vector.load %arg8[%c0, %c0_1] : memref<128x128xf32, #tpu.memory_space<vmem>>, vector<128x128xf32>
    %c0_2 = arith.constant 0 : index
    %c0_3 = arith.constant 0 : index
    %4 = vector.load %arg2[%c0_2, %c0_3] : memref<128x128xbf16, #tpu.memory_space<vmem>>, vector<128x128xbf16>
    %c0_4 = arith.constant 0 : index
    %c0_5 = arith.constant 0 : index
    %5 = vector.load %arg3[%c0_4, %c0_5] : memref<128x128xbf16, #tpu.memory_space<vmem>>, vector<128x128xbf16>
    %cst = arith.constant dense<0.000000e+00> : vector<128x128xf32>
    %6 = tpu.matmul %4, %5, %cst {dimension_numbers = #tpu.dot_dimension_numbers<[1], [0], [0], [1], [0, 0, 1, 1], [], []>} : vector<128x128xbf16>, vector<128x128xbf16>, vector<128x128xf32> -> vector<128x128xf32>
    %7 = arith.addf %3, %6 : vector<128x128xf32>
    %c0_6 = arith.constant 0 : index
    %c0_7 = arith.constant 0 : index
    %8 = vector.load %arg8[%c0_6, %c0_7] : memref<128x128xf32, #tpu.memory_space<vmem>>, vector<128x128xf32>
    tpu.vector_store %arg8[%c0_6, %c0_7], %7 {strides = array<i32>} : memref<128x128xf32, #tpu.memory_space<vmem>>, vector<128x128xf32>,
    %c1_i32 = arith.constant 1 : i32
    %9 = arith.cmpi eq, %arg1, %c1_i32 : i32
    %10 = arith.extui %9 : i1 to i32
    %c0_i32_8 = arith.constant 0 : i32
    %11 = arith.cmpi ne, %10, %c0_i32_8 : i32
    scf.if %11 {
      %c0_9 = arith.constant 0 : index
      %c0_10 = arith.constant 0 : index
      %12 = vector.load %arg8[%c0_9, %c0_10] : memref<128x128xf32, #tpu.memory_space<vmem>>, vector<128x128xf32>
      %13 = arith.truncf %12 : vector<128x128xf32> to vector<128x128xbf16>
      %c0_11 = arith.constant 0 : index
      %c0_12 = arith.constant 0 : index
      %14 = vector.load %arg7[%c0_11, %c0_12] : memref<128x128xbf16, #tpu.memory_space<vmem>>, vector<128x128xbf16>
      tpu.vector_store %arg7[%c0_11, %c0_12], %13 {strides = array<i32>} : memref<128x128xbf16, #tpu.memory_space<vmem>>, vector<128x128xbf16>,
    } else {
    }
    return
  }
  func.func @transform_0(%arg0: i32, %arg1: i32) -> (i32, i32) {
    %c0_i32 = arith.constant 0 : i32
    return %arg0, %arg1 : i32, i32
  }
  func.func @transform_1(%arg0: i32, %arg1: i32) -> (i32, i32) {
    %c0_i32 = arith.constant 0 : i32
    %c0_i32_0 = arith.constant 0 : i32
    return %arg1, %c0_i32 : i32, i32
  }
  func.func @transform_2(%arg0: i32, %arg1: i32) -> (i32, i32) {
    %c0_i32 = arith.constant 0 : i32
    %c0_i32_0 = arith.constant 0 : i32
    return %arg0, %c0_i32 : i32, i32
  }
  func.func @transform_3(%arg0: i32, %arg1: i32) -> (i32, i32) {
    %c0_i32 = arith.constant 0 : i32
    %c0_i32_0 = arith.constant 0 : i32
    %c0_i32_1 = arith.constant 0 : i32
    return %c0_i32, %c0_i32_0 : i32, i32
  }
  func.func @transform_4(%arg0: i32, %arg1: i32) -> (i32, i32) {
    %c0_i32 = arith.constant 0 : i32
    %c0_i32_0 = arith.constant 0 : i32
    %c0_i32_1 = arith.constant 0 : i32
    return %c0_i32, %c0_i32_0 : i32, i32
  }
  func.func @transform_5(%arg0: i32, %arg1: i32) -> (i32, i32) {
    %c0_i32 = arith.constant 0 : i32
    %c0_i32_0 = arith.constant 0 : i32
    return %arg0, %c0_i32 : i32, i32
  }
}

</mosaic_0001>

<llo_original>
// kernel: tagraph_forward.3
$region0: #{tagraph_forward.3}
  #allocation0 [shape = 'u32[]', space=smem, size = 0x4, offset = 0x4, fixed_abs, tag = 'smem constant byte address 0x4 - core index']
  #allocation1 [shape = 'u32[72,128]{1,0:T(1,128)}', space=vmem, size = 0x9000, scoped, tag = 'internal scratch']
  %s0 = inlined_call_operand.vmem [shape: bf16[256,32], index: 0, kind: input, shape index: {}]
  %s1 = inlined_call_operand.vmem [shape: bf16[32,128], index: 1, kind: input, shape index: {}]
  %s2 = inlined_call_operand.vmem [shape: bf16[256,128], index: 2, kind: output, shape index: {}]
  %s3 = sld [smem:[#allocation0]]
  $region41: #{tagraph_forward.3} parent=0
    _
  %s5 = ssub.s32 1, %s3
  %s6 = scalar_select 0, %s5, %s3
  loop: start=0, step=1, limit=4
  $region2: #{tagraph_forward.3} parent=0 // loop_pre_header
    _
  $region3: #{tagraph_forward.3} parent=0 // loop_header
    %s8 = sphi 0, %s12
    %p9 = scmp.ge.s32.totalorder %s8, 4
    %s18 = sphi 0, %s20
    %s21 = sphi 0, %s18
    %s22 = sphi 0, %s21
    %s38 = sphi 0, %s22
    %s42 = sphi 0, %s42
    %s44 = sphi 0, %s42
    %s45 = sphi 0, %s44
    %s59 = sphi 0, %s45
    %s65 = sphi 0, %s67
    %s68 = sphi 0, %s65
    %s69 = sphi 0, %s68
    %s85 = sphi 0, %s69
  $region4: #{tagraph_forward.3} parent=0 // loop_header_branch
    %11 = sbr.rel (%p9) target = $region8
  $region5: #{tagraph_forward.3} parent=0 // loop_body
    %s13 = ssub.s32 %s8, 1
    %s14 = ssub.s32 %s8, 2
    %s15 = sadd.s32 %s8, 1
    %s16 = ssub.s32 %s8, %s15
    %p17 = scmp.eq.s32.totalorder %s16, 0
    %s19 = sadd.s32 %s18, 1
    %s20 = scalar_select %p17, %s18, %s19
    %p23 = pneg %p17
    %p24 = scmp.eq.s32.totalorder %s8, 1
    %p25 = por %p23, %p24
    %p26 = scmp.ne.s32.totalorder %s18, %s21
    %p27 = scmp.eq.s32.totalorder %s8, 0
    %p28 = por %p26, %p27
    %p29 = scmp.ne.s32.totalorder %s18, %s21
    %p30 = scmp.eq.s32.totalorder %s13, 1
    %p31 = por %p29, %p30
    %p32 = scmp.ne.s32.totalorder %s21, %s22
    %p33 = scmp.eq.s32.totalorder %s13, 0
    %p34 = por %p32, %p33
    %p35 = scmp.ne.s32.totalorder %s21, %s22
    %p36 = scmp.eq.s32.totalorder %s14, 1
    %p37 = por %p35, %p36
    %p39 = scmp.ne.s32.totalorder %s22, %s38
    %p40 = scmp.eq.s32.totalorder %s14, 0
    %p41 = por %p39, %p40
    %s43 = sadd.s32 %s42, 1
    %p46 = scmp.eq.s32.totalorder %s8, 1
    %p47 = scmp.ne.s32.totalorder %s42, %s44
    %p48 = scmp.eq.s32.totalorder %s8, 0
    %p49 = por %p47, %p48
    %p50 = scmp.ne.s32.totalorder %s42, %s44
    %p51 = scmp.eq.s32.totalorder %s13, 1
    %p52 = por %p50, %p51
    %p53 = scmp.ne.s32.totalorder %s44, %s45
    %p54 = scmp.eq.s32.totalorder %s13, 0
    %p55 = por %p53, %p54
    %p56 = scmp.ne.s32.totalorder %s44, %s45
    %p57 = scmp.eq.s32.totalorder %s14, 1
    %p58 = por %p56, %p57
    %p60 = scmp.ne.s32.totalorder %s45, %s59
    %p61 = scmp.eq.s32.totalorder %s14, 0
    %p62 = por %p60, %p61
    %s63 = ssub.s32 %s8, %s15
    %p64 = scmp.eq.s32.totalorder %s63, 0
    %s66 = sadd.s32 %s65, 1
    %s67 = scalar_select %p64, %s65, %s66
    %p70 = pneg %p64
    %p71 = scmp.eq.s32.totalorder %s8, 1
    %p72 = por %p70, %p71
    %p73 = scmp.ne.s32.totalorder %s65, %s68
    %p74 = scmp.eq.s32.totalorder %s8, 0
    %p75 = por %p73, %p74
    %p76 = scmp.ne.s32.totalorder %s65, %s68
    %p77 = scmp.eq.s32.totalorder %s13, 1
    %p78 = por %p76, %p77
    %p79 = scmp.ne.s32.totalorder %s68, %s69
    %p80 = scmp.eq.s32.totalorder %s13, 0
    %p81 = por %p79, %p80
    %p82 = scmp.ne.s32.totalorder %s68, %s69
    %p83 = scmp.eq.s32.totalorder %s14, 1
    %p84 = por %p82, %p83
    %p86 = scmp.ne.s32.totalorder %s69, %s85
    %p87 = scmp.eq.s32.totalorder %s14, 0
    %p88 = por %p86, %p87
    %p89 = scmp.le.s32.totalorder 1, %s8
    %p90 = scmp.lt.s32.totalorder %s8, 3
    %p91 = pnand %p89, %p90
    %p92 = pneg %p91
    // Predicated region
    $region9: #{tagraph_forward.3} parent=5 // pred_check
      _
    $region10: #{tagraph_forward.3} parent=5 // pred_check_branch
      %94 = sbr.rel (%p91) target = $region12
    $region11: #{tagraph_forward.3} parent=5 // pred_region
      %s95 = ssub.s32 %s8, 1
      // Predicated region
      $region13: #{tagraph_forward.3} parent=11 // pred_check
        %p96 = pneg %p55
      $region14: #{tagraph_forward.3} parent=11 // pred_check_branch
        %98 = sbr.rel (%p96) target = $region16
      $region15: #{tagraph_forward.3} parent=11 // pred_region
        _
      $region16: #{tagraph_forward.3} parent=11 // pred_fallthru
        _
    $region12: #{tagraph_forward.3} parent=5 // pred_fallthru
      _
    %p99 = scmp.lt.s32.totalorder %s8, 2
    // Predicated region
    $region17: #{tagraph_forward.3} parent=5 // pred_check
      %p100 = pneg %p99
    $region18: #{tagraph_forward.3} parent=5 // pred_check_branch
      %102 = sbr.rel (%p100) target = $region20
    $region19: #{tagraph_forward.3} parent=5 // pred_region
      // Predicated region
      $region21: #{tagraph_forward.3} parent=19 // pred_check
        %p103 = pneg %p28
      $region22: #{tagraph_forward.3} parent=19 // pred_check_branch
        %105 = sbr.rel (%p103) target = $region24
      $region23: #{tagraph_forward.3} parent=19 // pred_region
        %s106 = smul.u32 16, %s8
        %p107 = scmp.lt.s32.totalorder %s106, 31
        %s108 = scalar_select %p107, %s106, 31
        %s109 = smul.addr %s108, 4
        %s110 = scalar_lea.vmem %s0, %s109
        %s111 = smul.u32 16, %s8
      $region24: #{tagraph_forward.3} parent=19 // pred_fallthru
        _
    $region20: #{tagraph_forward.3} parent=5 // pred_fallthru
      _
    %p112 = scmp.le.s32.totalorder 1, %s8
    %p113 = scmp.lt.s32.totalorder %s8, 3
    %p114 = pnand %p112, %p113
    %p115 = pneg %p114
    // Predicated region
    $region25: #{tagraph_forward.3} parent=5 // pred_check
      _
    $region26: #{tagraph_forward.3} parent=5 // pred_check_branch
      %117 = sbr.rel (%p114) target = $region28
    $region27: #{tagraph_forward.3} parent=5 // pred_region
      %s118 = ssub.s32 %s8, 1
      %s119 = smul.u32 16, %s13
      %p120 = scmp.lt.s32.totalorder %s119, 31
      %s121 = scalar_select %p120, %s119, 31
      %s122 = smul.addr %s121, 4
      %s123 = scalar_lea.vmem %s0, %s122
      %p124 = pneg %p34
      %p125 = pneg %p31
      %p126 = pneg %p55
      %p127 = pneg %p52
      %p128 = pneg %p81
      %p129 = pneg %p78
      %s130 = smul.u32 16, %s13
      %p131 = scmp.lt.s32.totalorder %s130, 31
      %s132 = scalar_select %p131, %s130, 31
      %s133 = smul.addr %s132, 4
      %s134 = scalar_lea.vmem %s2, %s133
      %s135 = smul.u32 16, %s13
      %p136 = scmp.lt.s32.totalorder %s135, 31
      %s137 = scalar_select %p136, %s135, 31
      %s138 = smul.addr %s137, 4
      %s139 = scalar_lea.vmem %s0, %s138
      %s140 = smul.u32 16, %s13
      %s141 = smul.u32 16, %s13
      %p142 = scmp.lt.s32.totalorder %s141, 31
      %s143 = scalar_select %p142, %s141, 31
      %s144 = smul.addr %s143, 4
      %s145 = scalar_lea.vmem %s2, %s144
      %s146 = smul.u32 16, %s13
      %v148 = vld [vmem:[%s139] sm:$0xf]
      %v149 = vld [vmem:[%s139 + $0x4] sm:$0xf]
      %v150 = vld [vmem:[%s139 + $0x8] sm:$0xf]
      %v151 = vld [vmem:[%s139 + $0xc] sm:$0xf]
      %v152 = vld [vmem:[%s139 + $0x10] sm:$0xf]
      %v153 = vld [vmem:[%s139 + $0x14] sm:$0xf]
      %v154 = vld [vmem:[%s139 + $0x18] sm:$0xf]
      %v155 = vld [vmem:[%s139 + $0x1c] sm:$0xf]
      %v156 = vld [vmem:[%s139 + $0x20] sm:$0xf]
      %v157 = vld [vmem:[%s139 + $0x24] sm:$0xf]
      %v158 = vld [vmem:[%s139 + $0x28] sm:$0xf]
      %v159 = vld [vmem:[%s139 + $0x2c] sm:$0xf]
      %v160 = vld [vmem:[%s139 + $0x30] sm:$0xf]
      %v161 = vld [vmem:[%s139 + $0x34] sm:$0xf]
      %v162 = vld [vmem:[%s139 + $0x38] sm:$0xf]
      %v163 = vld [vmem:[%s139 + $0x3c] sm:$0xf]
      %v164 = vld [vmem:[%s1] sm:$0xf]
      %v165 = vld [vmem:[%s1 + $0x4] sm:$0xf]
      %v166 = vld [vmem:[%s1 + $0x8] sm:$0xf]
      %v167 = vld [vmem:[%s1 + $0xc] sm:$0xf]
      %v184 = vunpack.c.l.b16 %v148
      %v185 = vunpack.c.l.b16 %v149
      %v186 = vunpack.c.l.b16 %v150
      %v187 = vunpack.c.l.b16 %v151
      %v188 = vunpack.c.l.b16 %v152
      %v189 = vunpack.c.l.b16 %v153
      %v190 = vunpack.c.l.b16 %v154
      %v191 = vunpack.c.l.b16 %v155
      %v192 = vunpack.c.l.b16 %v156
      %v193 = vunpack.c.l.b16 %v157
      %v194 = vunpack.c.l.b16 %v158
      %v195 = vunpack.c.l.b16 %v159
      %v196 = vunpack.c.l.b16 %v160
      %v197 = vunpack.c.l.b16 %v161
      %v198 = vunpack.c.l.b16 %v162
      %v199 = vunpack.c.l.b16 %v163
      %v200 = vpack.c.b16 %v185, %v184
      %v201 = vpack.c.b16 %v187, %v186
      %v202 = vpack.c.b16 %v189, %v188
      %v203 = vpack.c.b16 %v191, %v190
      %v204 = vpack.c.b16 %v193, %v192
      %v205 = vpack.c.b16 %v195, %v194
      %v206 = vpack.c.b16 %v197, %v196
      %v207 = vpack.c.b16 %v199, %v198
      %v212 = vunpack.c.l.b16 %v164
      %v213 = vunpack.c.l.b16 %v165
      %v214 = vunpack.c.l.b16 %v166
      %v215 = vunpack.c.l.b16 %v167
      %v216 = vpack.c.b16 %v213, %v212
      %v217 = vpack.c.b16 %v215, %v214
      %vm220 = vcmask 261120
      %v222 = vsel %vm220, %v200, 0
      %v225 = vsel %vm220, %v201, 0
      %v228 = vsel %vm220, %v202, 0
      %v231 = vsel %vm220, %v203, 0
      %v234 = vsel %vm220, %v204, 0
      %v237 = vsel %vm220, %v205, 0
      %v240 = vsel %vm220, %v206, 0
      %v243 = vsel %vm220, %v207, 0
      %245 = vmatpush.bf16.msra.mxu0 0
      %246 = vmatpush.bf16.msra.mxu0 0
      %247 = vmatpush.bf16.msra.mxu0 0
      %248 = vmatpush.bf16.msra.mxu0 0
      %249 = vmatpush.bf16.msra.mxu0 0
      %250 = vmatpush.bf16.msra.mxu0 0
      %251 = vmatpush.bf16.msra.mxu0 %v217
      %252 = vmatpush.bf16.msra.mxu0 %v216
      %253 = vmatmul.bf16.gmra.mxu0 %v222
      %v254 = vpop.f32.mrf.mxu0
      %v255 = vadd.f32 0.0, %v254
      %v256 = vpop.f32.mrf.mxu0
      %v257 = vadd.f32 0.0, %v256
      %258 = vmatmul.bf16.gmra.mxu0 %v225
      %v259 = vpop.f32.mrf.mxu0
      %v260 = vadd.f32 0.0, %v259
      %v261 = vpop.f32.mrf.mxu0
      %v262 = vadd.f32 0.0, %v261
      %263 = vmatmul.bf16.gmra.mxu0 %v228
      %v264 = vpop.f32.mrf.mxu0
      %v265 = vadd.f32 0.0, %v264
      %v266 = vpop.f32.mrf.mxu0
      %v267 = vadd.f32 0.0, %v266
      %268 = vmatmul.bf16.gmra.mxu0 %v231
      %v269 = vpop.f32.mrf.mxu0
      %v270 = vadd.f32 0.0, %v269
      %v271 = vpop.f32.mrf.mxu0
      %v272 = vadd.f32 0.0, %v271
      %273 = vmatmul.bf16.gmra.mxu0 %v234
      %v274 = vpop.f32.mrf.mxu0
      %v275 = vadd.f32 0.0, %v274
      %v276 = vpop.f32.mrf.mxu0
      %v277 = vadd.f32 0.0, %v276
      %278 = vmatmul.bf16.gmra.mxu0 %v237
      %v279 = vpop.f32.mrf.mxu0
      %v280 = vadd.f32 0.0, %v279
      %v281 = vpop.f32.mrf.mxu0
      %v282 = vadd.f32 0.0, %v281
      %283 = vmatmul.bf16.gmra.mxu0 %v240
      %v284 = vpop.f32.mrf.mxu0
      %v285 = vadd.f32 0.0, %v284
      %v286 = vpop.f32.mrf.mxu0
      %v287 = vadd.f32 0.0, %v286
      %288 = vmatmul.bf16.gmra.mxu0 %v243
      %v289 = vpop.f32.mrf.mxu0
      %v290 = vadd.f32 0.0, %v289
      %v291 = vpop.f32.mrf.mxu0
      %v292 = vadd.f32 0.0, %v291
      %293 = vdwg.mxu0
      %v294 = vpack.c.bf16 %v255, %v255
      %v295 = vpack.c.bf16 %v257, %v257
      %v296 = vpack.c.bf16 %v260, %v260
      %v297 = vpack.c.bf16 %v262, %v262
      %v298 = vpack.c.bf16 %v265, %v265
      %v299 = vpack.c.bf16 %v267, %v267
      %v300 = vpack.c.bf16 %v270, %v270
      %v301 = vpack.c.bf16 %v272, %v272
      %v302 = vpack.c.bf16 %v275, %v275
      %v303 = vpack.c.bf16 %v277, %v277
      %v304 = vpack.c.bf16 %v280, %v280
      %v305 = vpack.c.bf16 %v282, %v282
      %v306 = vpack.c.bf16 %v285, %v285
      %v307 = vpack.c.bf16 %v287, %v287
      %v308 = vpack.c.bf16 %v290, %v290
      %v309 = vpack.c.bf16 %v292, %v292
      %310 = vst [vmem:[%s145] sm:$0xf] %v294
      %311 = vst [vmem:[%s145 + $0x4] sm:$0xf] %v295
      %312 = vst [vmem:[%s145 + $0x8] sm:$0xf] %v296
      %313 = vst [vmem:[%s145 + $0xc] sm:$0xf] %v297
      %314 = vst [vmem:[%s145 + $0x10] sm:$0xf] %v298
      %315 = vst [vmem:[%s145 + $0x14] sm:$0xf] %v299
      %316 = vst [vmem:[%s145 + $0x18] sm:$0xf] %v300
      %317 = vst [vmem:[%s145 + $0x1c] sm:$0xf] %v301
      %318 = vst [vmem:[%s145 + $0x20] sm:$0xf] %v302
      %319 = vst [vmem:[%s145 + $0x24] sm:$0xf] %v303
      %320 = vst [vmem:[%s145 + $0x28] sm:$0xf] %v304
      %321 = vst [vmem:[%s145 + $0x2c] sm:$0xf] %v305
      %322 = vst [vmem:[%s145 + $0x30] sm:$0xf] %v306
      %323 = vst [vmem:[%s145 + $0x34] sm:$0xf] %v307
      %324 = vst [vmem:[%s145 + $0x38] sm:$0xf] %v308
      %325 = vst [vmem:[%s145 + $0x3c] sm:$0xf] %v309
      %s326 = smul.u32 16, %s13
      %p327 = scmp.lt.s32.totalorder %s326, 31
      %s328 = scalar_select %p327, %s326, 31
      %s329 = smul.addr %s328, 4
      %s330 = scalar_lea.vmem %s2, %s329
      // Predicated region
      $region29: #{tagraph_forward.3} parent=27 // pred_check
        %p331 = pneg %p78
      $region30: #{tagraph_forward.3} parent=27 // pred_check_branch
        %333 = sbr.rel (%p331) target = $region32
      $region31: #{tagraph_forward.3} parent=27 // pred_region
        %s334 = smul.u32 16, %s13
      $region32: #{tagraph_forward.3} parent=27 // pred_fallthru
        _
    $region28: #{tagraph_forward.3} parent=5 // pred_fallthru
      _
    %p335 = scmp.le.s32.totalorder 2, %s8
    // Predicated region
    $region33: #{tagraph_forward.3} parent=5 // pred_check
      %p336 = pneg %p335
    $region34: #{tagraph_forward.3} parent=5 // pred_check_branch
      %338 = sbr.rel (%p336) target = $region36
    $region35: #{tagraph_forward.3} parent=5 // pred_region
      %s339 = ssub.s32 %s8, 2
      // Predicated region
      $region37: #{tagraph_forward.3} parent=35 // pred_check
        %p340 = pneg %p84
      $region38: #{tagraph_forward.3} parent=35 // pred_check_branch
        %342 = sbr.rel (%p340) target = $region40
      $region39: #{tagraph_forward.3} parent=35 // pred_region
        %s343 = smul.u32 16, %s14
        %p344 = scmp.lt.s32.totalorder %s343, 31
        %s345 = scalar_select %p344, %s343, 31
        %s346 = smul.addr %s345, 4
        %s347 = scalar_lea.vmem %s2, %s346
      $region40: #{tagraph_forward.3} parent=35 // pred_fallthru
        _
    $region36: #{tagraph_forward.3} parent=5 // pred_fallthru
      _
  $region6: #{tagraph_forward.3} parent=0 // loop_footer
    %s12 = sadd.s32 1, %s8
  $region7: #{tagraph_forward.3} parent=0 // loop_footer_branch
    %7 = sbr.rel target = $region3
  $region8: #{tagraph_forward.3} parent=0 // loop_exit
    _

// kernel: tagraph_forward.5
$region0: #{tagraph_forward.5}
  #allocation0 [shape = 'u32[]', space=smem, size = 0x4, offset = 0x4, fixed_abs, tag = 'smem constant byte address 0x4 - core index']
  #allocation1 [shape = 'u32[72,128]{1,0:T(1,128)}', space=vmem, size = 0x9000, scoped, tag = 'internal scratch']
  #allocation2 [shape = 'f32[128,128]{1,0:T(8,128)}', space=vmem, size = 0x10000, scoped, tag = 'scratch operand']
  %s0 = inlined_call_operand.vmem [shape: bf16[256,256], index: 0, kind: input, shape index: {}]
  %s1 = inlined_call_operand.vmem [shape: bf16[256,128], index: 1, kind: input, shape index: {}]
  %s2 = inlined_call_operand.vmem [shape: bf16[256,32], index: 2, kind: input, shape index: {}]
  %s3 = inlined_call_operand.vmem [shape: bf16[32,128], index: 3, kind: input, shape index: {}]
  %s4 = inlined_call_operand.vmem [shape: f32[1,128], index: 4, kind: input, shape index: {}]
  %s5 = inlined_call_operand.vmem [shape: f32[256,128], index: 5, kind: output, shape index: {}]
  %s6 = sld [smem:[#allocation0]]
  $region102: #{tagraph_forward.5} parent=0
    _
  %s8 = ssub.s32 1, %s6
  %s9 = scalar_select 0, %s8, %s6
  $region1: #{tagraph_forward.5} parent=0
    #allocation3 [shape = 'u8[65536]{0}', space=vmem, size = 0x10000, scoped, tag = 'input window, operand 0']
    loop: start=0, step=1, limit=6
    $region2: #{tagraph_forward.5} parent=1 // loop_pre_header
      _
    $region3: #{tagraph_forward.5} parent=1 // loop_header
      %s11 = sphi 0, %s15
      %p12 = scmp.ge.s32.totalorder %s11, 6
      %s18 = sphi 0, %s30
      %s19 = sphi 0, %s26
      %s20 = sphi 0, %s18
      %s21 = sphi 0, %s19
      %s22 = sphi 0, %s20
      %s23 = sphi 0, %s21
      %s35 = sphi 0, %s37
      %s38 = sphi 0, %s35
      %s39 = sphi 0, %s38
      %s55 = sphi 0, %s39
      %s61 = sphi 0, %s63
      %s64 = sphi 0, %s61
      %s65 = sphi 0, %s64
      %s81 = sphi 0, %s65
      %s87 = sphi 0, %s89
      %s90 = sphi 0, %s87
      %s91 = sphi 0, %s90
      %s107 = sphi 0, %s91
      %s111 = sphi 0, %s111
      %s113 = sphi 0, %s111
      %s114 = sphi 0, %s113
      %s128 = sphi 0, %s114
      %s132 = sphi 0, %s132
      %s134 = sphi 0, %s132
      %s135 = sphi 0, %s134
      %s149 = sphi 0, %s135
      %s155 = sphi 0, %s157
      %s158 = sphi 0, %s155
      %s159 = sphi 0, %s158
      %s175 = sphi 0, %s159
    $region4: #{tagraph_forward.5} parent=1 // loop_header_branch
      %14 = sbr.rel (%p12) target = $region8
    $region5: #{tagraph_forward.5} parent=1 // loop_body
      %s16 = ssub.s32 %s11, 1
      %s17 = ssub.s32 %s11, 2
      %s24 = sadd.s32 1, %s19
      %p25 = scmp.ge.s32.totalorder %s24, 2
      %s26 = scalar_select %p25, 0, %s24
      %s27 = sadd.s32 1, %s18
      %s28 = scalar_select %p25, %s27, %s18
      %p29 = scmp.ge.s32.totalorder %s28, 2
      %s30 = scalar_select %p29, 0, %s28
      %s31 = ssub.s32 %s18, %s30
      %s32 = ssub.s32 %s19, %s26
      %s33 = sor.u32 %s31, %s32
      %p34 = scmp.eq.s32.totalorder %s33, 0
      %s36 = sadd.s32 %s35, 1
      %s37 = scalar_select %p34, %s35, %s36
      %p40 = pneg %p34
      %p41 = scmp.eq.s32.totalorder %s11, 3
      %p42 = por %p40, %p41
      %p43 = scmp.ne.s32.totalorder %s35, %s38
      %p44 = scmp.eq.s32.totalorder %s11, 0
      %p45 = por %p43, %p44
      %p46 = scmp.ne.s32.totalorder %s35, %s38
      %p47 = scmp.eq.s32.totalorder %s16, 3
      %p48 = por %p46, %p47
      %p49 = scmp.ne.s32.totalorder %s38, %s39
      %p50 = scmp.eq.s32.totalorder %s16, 0
      %p51 = por %p49, %p50
      %p52 = scmp.ne.s32.totalorder %s38, %s39
      %p53 = scmp.eq.s32.totalorder %s17, 3
      %p54 = por %p52, %p53
      %p56 = scmp.ne.s32.totalorder %s39, %s55
      %p57 = scmp.eq.s32.totalorder %s17, 0
      %p58 = por %p56, %p57
      %s59 = ssub.s32 %s19, %s26
      %p60 = scmp.eq.s32.totalorder %s59, 0
      %s62 = sadd.s32 %s61, 1
      %s63 = scalar_select %p60, %s61, %s62
      %p66 = pneg %p60
      %p67 = scmp.eq.s32.totalorder %s11, 3
      %p68 = por %p66, %p67
      %p69 = scmp.ne.s32.totalorder %s61, %s64
      %p70 = scmp.eq.s32.totalorder %s11, 0
      %p71 = por %p69, %p70
      %p72 = scmp.ne.s32.totalorder %s61, %s64
      %p73 = scmp.eq.s32.totalorder %s16, 3
      %p74 = por %p72, %p73
      %p75 = scmp.ne.s32.totalorder %s64, %s65
      %p76 = scmp.eq.s32.totalorder %s16, 0
      %p77 = por %p75, %p76
      %p78 = scmp.ne.s32.totalorder %s64, %s65
      %p79 = scmp.eq.s32.totalorder %s17, 3
      %p80 = por %p78, %p79
      %p82 = scmp.ne.s32.totalorder %s65, %s81
      %p83 = scmp.eq.s32.totalorder %s17, 0
      %p84 = por %p82, %p83
      %s85 = ssub.s32 %s18, %s30
      %p86 = scmp.eq.s32.totalorder %s85, 0
      %s88 = sadd.s32 %s87, 1
      %s89 = scalar_select %p86, %s87, %s88
      %p92 = pneg %p86
      %p93 = scmp.eq.s32.totalorder %s11, 3
      %p94 = por %p92, %p93
      %p95 = scmp.ne.s32.totalorder %s87, %s90
      %p96 = scmp.eq.s32.totalorder %s11, 0
      %p97 = por %p95, %p96
      %p98 = scmp.ne.s32.totalorder %s87, %s90
      %p99 = scmp.eq.s32.totalorder %s16, 3
      %p100 = por %p98, %p99
      %p101 = scmp.ne.s32.totalorder %s90, %s91
      %p102 = scmp.eq.s32.totalorder %s16, 0
      %p103 = por %p101, %p102
      %p104 = scmp.ne.s32.totalorder %s90, %s91
      %p105 = scmp.eq.s32.totalorder %s17, 3
      %p106 = por %p104, %p105
      %p108 = scmp.ne.s32.totalorder %s91, %s107
      %p109 = scmp.eq.s32.totalorder %s17, 0
      %p110 = por %p108, %p109
      %s112 = sadd.s32 %s111, 1
      %p115 = scmp.eq.s32.totalorder %s11, 3
      %p116 = scmp.ne.s32.totalorder %s111, %s113
      %p117 = scmp.eq.s32.totalorder %s11, 0
      %p118 = por %p116, %p117
      %p119 = scmp.ne.s32.totalorder %s111, %s113
      %p120 = scmp.eq.s32.totalorder %s16, 3
      %p121 = por %p119, %p120
      %p122 = scmp.ne.s32.totalorder %s113, %s114
      %p123 = scmp.eq.s32.totalorder %s16, 0
      %p124 = por %p122, %p123
      %p125 = scmp.ne.s32.totalorder %s113, %s114
      %p126 = scmp.eq.s32.totalorder %s17, 3
      %p127 = por %p125, %p126
      %p129 = scmp.ne.s32.totalorder %s114, %s128
      %p130 = scmp.eq.s32.totalorder %s17, 0
      %p131 = por %p129, %p130
      %s133 = sadd.s32 %s132, 1
      %p136 = scmp.eq.s32.totalorder %s11, 3
      %p137 = scmp.ne.s32.totalorder %s132, %s134
      %p138 = scmp.eq.s32.totalorder %s11, 0
      %p139 = por %p137, %p138
      %p140 = scmp.ne.s32.totalorder %s132, %s134
      %p141 = scmp.eq.s32.totalorder %s16, 3
      %p142 = por %p140, %p141
      %p143 = scmp.ne.s32.totalorder %s134, %s135
      %p144 = scmp.eq.s32.totalorder %s16, 0
      %p145 = por %p143, %p144
      %p146 = scmp.ne.s32.totalorder %s134, %s135
      %p147 = scmp.eq.s32.totalorder %s17, 3
      %p148 = por %p146, %p147
      %p150 = scmp.ne.s32.totalorder %s135, %s149
      %p151 = scmp.eq.s32.totalorder %s17, 0
      %p152 = por %p150, %p151
      %s153 = ssub.s32 %s18, %s30
      %p154 = scmp.eq.s32.totalorder %s153, 0
      %s156 = sadd.s32 %s155, 1
      %s157 = scalar_select %p154, %s155, %s156
      %p160 = pneg %p154
      %p161 = scmp.eq.s32.totalorder %s11, 3
      %p162 = por %p160, %p161
      %p163 = scmp.ne.s32.totalorder %s155, %s158
      %p164 = scmp.eq.s32.totalorder %s11, 0
      %p165 = por %p163, %p164
      %p166 = scmp.ne.s32.totalorder %s155, %s158
      %p167 = scmp.eq.s32.totalorder %s16, 3
      %p168 = por %p166, %p167
      %p169 = scmp.ne.s32.totalorder %s158, %s159
      %p170 = scmp.eq.s32.totalorder %s16, 0
      %p171 = por %p169, %p170
      %p172 = scmp.ne.s32.totalorder %s158, %s159
      %p173 = scmp.eq.s32.totalorder %s17, 3
      %p174 = por %p172, %p173
      %p176 = scmp.ne.s32.totalorder %s159, %s175
      %p177 = scmp.eq.s32.totalorder %s17, 0
      %p178 = por %p176, %p177
      %p179 = scmp.le.s32.totalorder 1, %s11
      %p180 = scmp.lt.s32.totalorder %s11, 5
      %p181 = pnand %p179, %p180
      %p182 = pneg %p181
      // Predicated region
      $region9: #{tagraph_forward.5} parent=5 // pred_check
        _
      $region10: #{tagraph_forward.5} parent=5 // pred_check_branch
        %184 = sbr.rel (%p181) target = $region12
      $region11: #{tagraph_forward.5} parent=5 // pred_region
        %s185 = ssub.s32 %s11, 1
        // Predicated region
        $region13: #{tagraph_forward.5} parent=11 // pred_check
          %p186 = pneg %p124
        $region14: #{tagraph_forward.5} parent=11 // pred_check_branch
          %188 = sbr.rel (%p186) target = $region16
        $region15: #{tagraph_forward.5} parent=11 // pred_region
          _
        $region16: #{tagraph_forward.5} parent=11 // pred_fallthru
          _
        // Predicated region
        $region17: #{tagraph_forward.5} parent=11 // pred_check
          %p189 = pneg %p145
        $region18: #{tagraph_forward.5} parent=11 // pred_check_branch
          %191 = sbr.rel (%p189) target = $region20
        $region19: #{tagraph_forward.5} parent=11 // pred_region
          _
        $region20: #{tagraph_forward.5} parent=11 // pred_fallthru
          _
      $region12: #{tagraph_forward.5} parent=5 // pred_fallthru
        _
      %p192 = scmp.lt.s32.totalorder %s11, 4
      // Predicated region
      $region21: #{tagraph_forward.5} parent=5 // pred_check
        %p193 = pneg %p192
      $region22: #{tagraph_forward.5} parent=5 // pred_check_branch
        %195 = sbr.rel (%p193) target = $region24
      $region23: #{tagraph_forward.5} parent=5 // pred_region
        // Predicated region
        $region25: #{tagraph_forward.5} parent=23 // pred_check
          %p196 = pneg %p45
        $region26: #{tagraph_forward.5} parent=23 // pred_check_branch
          %198 = sbr.rel (%p196) target = $region28
        $region27: #{tagraph_forward.5} parent=23 // pred_region
          %s199 = sand.u32 %s35, 1
          %s200 = sand.u32 %s35, 1
          %s201 = smul.addr %s200, 64
          %s202 = scalar_lea.vmem [#allocation3], %s201
          %s203 = smul.u32 16, %s18
          %s204 = smul.addr %s203, 2
          %s205 = sadd.s32 %s19, %s204
          %s206 = smul.addr %s205, 4
          %s207 = scalar_lea.vmem %s0, %s206
          // Predicated region
          $region29: #{tagraph_forward.5} parent=27 // pred_check
            _
          $region30: #{tagraph_forward.5} parent=27 // pred_check_branch
            %209 = sbr.rel (0) target = $region32
          $region31: #{tagraph_forward.5} parent=27 // pred_region
            // Predicated region
            $region33: #{tagraph_forward.5} parent=31 // pred_check
              _
            $region34: #{tagraph_forward.5} parent=31 // pred_check_branch
              %211 = sbr.rel target = $region36
            $region35: #{tagraph_forward.5} parent=31 // pred_region
              // Predicated region
              $region48: #{tagraph_forward.5} parent=35 // pred_check
                _
              $region49: #{tagraph_forward.5} parent=35 // pred_check_branch
                %257 = sbr.rel (0) target = $region51
              $region50: #{tagraph_forward.5} parent=35 // pred_region
                loop: start=0, step=1, limit=1
                $region52: #{tagraph_forward.5} parent=50 // loop_pre_header
                  _
                $region53: #{tagraph_forward.5} parent=50 // loop_header
                  %s259 = sphi 0, %s263
                  %p260 = scmp.ge.s32.totalorder %s259, 1
                  %s264 = sphi %s207, %s207
                  %s265 = sphi %s202, %s202
                $region54: #{tagraph_forward.5} parent=50 // loop_header_branch
                  %262 = sbr.rel (%p260) target = $region58
                $region55: #{tagraph_forward.5} parent=50 // loop_body
                  _
                $region56: #{tagraph_forward.5} parent=50 // loop_footer
                  %s263 = sadd.s32 1, %s259
                $region57: #{tagraph_forward.5} parent=50 // loop_footer_branch
                  %258 = sbr.rel target = $region53
                $region58: #{tagraph_forward.5} parent=50 // loop_exit
                  _
                %s267 = ssub.s32 16, 1
                loop: start=0, step=1, limit=1
                $region59: #{tagraph_forward.5} parent=50 // loop_pre_header
                  _
                $region60: #{tagraph_forward.5} parent=50 // loop_header
                  %s269 = sphi 0, %s273
                  %p270 = scmp.ge.s32.totalorder %s269, 1
                  %s274 = sphi %s207, %s207
                  %s275 = sphi %s202, %s202
                $region61: #{tagraph_forward.5} parent=50 // loop_header_branch
                  %272 = sbr.rel (%p270) target = $region65
                $region62: #{tagraph_forward.5} parent=50 // loop_body
                  %v276 = vld [vmem:[%s274] sm:%s267]
                  %277 = vst [vmem:[%s275] sm:%s267] %v276
                  %v278 = vld [vmem:[%s274 + $0x8] sm:%s267]
                  %279 = vst [vmem:[%s275 + $0x4] sm:%s267] %v278
                  %v280 = vld [vmem:[%s274 + $0x10] sm:%s267]
                  %281 = vst [vmem:[%s275 + $0x8] sm:%s267] %v280
                  %v282 = vld [vmem:[%s274 + $0x18] sm:%s267]
                  %283 = vst [vmem:[%s275 + $0xc] sm:%s267] %v282
                  %v284 = vld [vmem:[%s274 + $0x20] sm:%s267]
                  %285 = vst [vmem:[%s275 + $0x10] sm:%s267] %v284
                  %v286 = vld [vmem:[%s274 + $0x28] sm:%s267]
                  %287 = vst [vmem:[%s275 + $0x14] sm:%s267] %v286
                  %v288 = vld [vmem:[%s274 + $0x30] sm:%s267]
                  %289 = vst [vmem:[%s275 + $0x18] sm:%s267] %v288
                  %v290 = vld [vmem:[%s274 + $0x38] sm:%s267]
                  %291 = vst [vmem:[%s275 + $0x1c] sm:%s267] %v290
                  %v292 = vld [vmem:[%s274 + $0x40] sm:%s267]
                  %293 = vst [vmem:[%s275 + $0x20] sm:%s267] %v292
                  %v294 = vld [vmem:[%s274 + $0x48] sm:%s267]
                  %295 = vst [vmem:[%s275 + $0x24] sm:%s267] %v294
                  %v296 = vld [vmem:[%s274 + $0x50] sm:%s267]
                  %297 = vst [vmem:[%s275 + $0x28] sm:%s267] %v296
                  %v298 = vld [vmem:[%s274 + $0x58] sm:%s267]
                  %299 = vst [vmem:[%s275 + $0x2c] sm:%s267] %v298
                  %v300 = vld [vmem:[%s274 + $0x60] sm:%s267]
                  %301 = vst [vmem:[%s275 + $0x30] sm:%s267] %v300
                  %v302 = vld [vmem:[%s274 + $0x68] sm:%s267]
                  %303 = vst [vmem:[%s275 + $0x34] sm:%s267] %v302
                  %v304 = vld [vmem:[%s274 + $0x70] sm:%s267]
                  %305 = vst [vmem:[%s275 + $0x38] sm:%s267] %v304
                  %v306 = vld [vmem:[%s274 + $0x78] sm:%s267]
                  %307 = vst [vmem:[%s275 + $0x3c] sm:%s267] %v306
                $region63: #{tagraph_forward.5} parent=50 // loop_footer
                  %s273 = sadd.s32 1, %s269
                $region64: #{tagraph_forward.5} parent=50 // loop_footer_branch
                  %268 = sbr.rel target = $region60
                $region65: #{tagraph_forward.5} parent=50 // loop_exit
                  _
              $region51: #{tagraph_forward.5} parent=35 // pred_fallthru
                _
            $region36: #{tagraph_forward.5} parent=31 // pred_fallthru
              _
            // Predicated region
            $region37: #{tagraph_forward.5} parent=31 // pred_check
              _
            $region38: #{tagraph_forward.5} parent=31 // pred_check_branch
              %213 = sbr.rel (0) target = $region40
            $region39: #{tagraph_forward.5} parent=31 // pred_region
              %s215 = ssub.s32 16, 1
              loop: start=0, step=1, limit=1
              $region41: #{tagraph_forward.5} parent=39 // loop_pre_header
                _
              $region42: #{tagraph_forward.5} parent=39 // loop_header
                %s217 = sphi 0, %s221
                %p218 = scmp.ge.s32.totalorder %s217, 1
                %s222 = sphi %s207, %s207
                %s223 = sphi %s202, %s202
              $region43: #{tagraph_forward.5} parent=39 // loop_header_branch
                %220 = sbr.rel (%p218) target = $region47
              $region44: #{tagraph_forward.5} parent=39 // loop_body
                %v224 = vld [vmem:[%s222] sm:%s215]
                %225 = vst [vmem:[%s223] sm:%s215] %v224
                %v226 = vld [vmem:[%s222 + $0x8] sm:%s215]
                %227 = vst [vmem:[%s223 + $0x4] sm:%s215] %v226
                %v228 = vld [vmem:[%s222 + $0x10] sm:%s215]
                %229 = vst [vmem:[%s223 + $0x8] sm:%s215] %v228
                %v230 = vld [vmem:[%s222 + $0x18] sm:%s215]
                %231 = vst [vmem:[%s223 + $0xc] sm:%s215] %v230
                %v232 = vld [vmem:[%s222 + $0x20] sm:%s215]
                %233 = vst [vmem:[%s223 + $0x10] sm:%s215] %v232
                %v234 = vld [vmem:[%s222 + $0x28] sm:%s215]
                %235 = vst [vmem:[%s223 + $0x14] sm:%s215] %v234
                %v236 = vld [vmem:[%s222 + $0x30] sm:%s215]
                %237 = vst [vmem:[%s223 + $0x18] sm:%s215] %v236
                %v238 = vld [vmem:[%s222 + $0x38] sm:%s215]
                %239 = vst [vmem:[%s223 + $0x1c] sm:%s215] %v238
                %v240 = vld [vmem:[%s222 + $0x40] sm:%s215]
                %241 = vst [vmem:[%s223 + $0x20] sm:%s215] %v240
                %v242 = vld [vmem:[%s222 + $0x48] sm:%s215]
                %243 = vst [vmem:[%s223 + $0x24] sm:%s215] %v242
                %v244 = vld [vmem:[%s222 + $0x50] sm:%s215]
                %245 = vst [vmem:[%s223 + $0x28] sm:%s215] %v244
                %v246 = vld [vmem:[%s222 + $0x58] sm:%s215]
                %247 = vst [vmem:[%s223 + $0x2c] sm:%s215] %v246
                %v248 = vld [vmem:[%s222 + $0x60] sm:%s215]
                %249 = vst [vmem:[%s223 + $0x30] sm:%s215] %v248
                %v250 = vld [vmem:[%s222 + $0x68] sm:%s215]
                %251 = vst [vmem:[%s223 + $0x34] sm:%s215] %v250
                %v252 = vld [vmem:[%s222 + $0x70] sm:%s215]
                %253 = vst [vmem:[%s223 + $0x38] sm:%s215] %v252
                %v254 = vld [vmem:[%s222 + $0x78] sm:%s215]
                %255 = vst [vmem:[%s223 + $0x3c] sm:%s215] %v254
              $region45: #{tagraph_forward.5} parent=39 // loop_footer
                %s221 = sadd.s32 1, %s217
              $region46: #{tagraph_forward.5} parent=39 // loop_footer_branch
                %216 = sbr.rel target = $region42
              $region47: #{tagraph_forward.5} parent=39 // loop_exit
                _
            $region40: #{tagraph_forward.5} parent=31 // pred_fallthru
              _
          $region32: #{tagraph_forward.5} parent=27 // pred_fallthru
            _
          %308 = vnop
        $region28: #{tagraph_forward.5} parent=23 // pred_fallthru
          _
        // Predicated region
        $region66: #{tagraph_forward.5} parent=23 // pred_check
          %p309 = pneg %p71
        $region67: #{tagraph_forward.5} parent=23 // pred_check_branch
          %311 = sbr.rel (%p309) target = $region69
        $region68: #{tagraph_forward.5} parent=23 // pred_region
          %s312 = smul.u32 16, %s19
          %p313 = scmp.lt.s32.totalorder %s312, 31
          %s314 = scalar_select %p313, %s312, 31
          %s315 = smul.addr %s314, 4
          %s316 = scalar_lea.vmem %s1, %s315
          %s317 = smul.u32 16, %s19
        $region69: #{tagraph_forward.5} parent=23 // pred_fallthru
          _
        // Predicated region
        $region70: #{tagraph_forward.5} parent=23 // pred_check
          %p318 = pneg %p97
        $region71: #{tagraph_forward.5} parent=23 // pred_check_branch
          %320 = sbr.rel (%p318) target = $region73
        $region72: #{tagraph_forward.5} parent=23 // pred_region
          %s321 = smul.u32 16, %s18
          %p322 = scmp.lt.s32.totalorder %s321, 31
          %s323 = scalar_select %p322, %s321, 31
          %s324 = smul.addr %s323, 4
          %s325 = scalar_lea.vmem %s2, %s324
          %s326 = smul.u32 16, %s18
        $region73: #{tagraph_forward.5} parent=23 // pred_fallthru
          _
      $region24: #{tagraph_forward.5} parent=5 // pred_fallthru
        _
      %p327 = scmp.le.s32.totalorder 1, %s11
      %p328 = scmp.lt.s32.totalorder %s11, 5
      %p329 = pnand %p327, %p328
      %p330 = pneg %p329
      // Predicated region
      $region74: #{tagraph_forward.5} parent=5 // pred_check
        _
      $region75: #{tagraph_forward.5} parent=5 // pred_check_branch
        %332 = sbr.rel (%p329) target = $region77
      $region76: #{tagraph_forward.5} parent=5 // pred_region
        %s333 = ssub.s32 %s11, 1
        %s334 = sand.u32 %s38, 1
        %s335 = sand.u32 %s38, 1
        %s336 = smul.addr %s335, 64
        %s337 = scalar_lea.vmem [#allocation3], %s336
        // Predicated region
        $region78: #{tagraph_forward.5} parent=76 // pred_check
          %p338 = pneg %p51
        $region79: #{tagraph_forward.5} parent=76 // pred_check_branch
          %340 = sbr.rel (%p338) target = $region81
        $region80: #{tagraph_forward.5} parent=76 // pred_region
          _
        $region81: #{tagraph_forward.5} parent=76 // pred_fallthru
          _
        %s341 = sand.u32 %s38, 1
        %s342 = sand.u32 %s38, 1
        %s343 = smul.addr %s342, 64
        %s344 = scalar_lea.vmem [#allocation3], %s343
        %p345 = pneg %p51
        %p346 = pneg %p48
        %s347 = smul.u32 16, %s21
        %p348 = scmp.lt.s32.totalorder %s347, 31
        %s349 = scalar_select %p348, %s347, 31
        %s350 = smul.addr %s349, 4
        %s351 = scalar_lea.vmem %s1, %s350
        %p352 = pneg %p77
        %p353 = pneg %p74
        %s354 = smul.u32 16, %s20
        %p355 = scmp.lt.s32.totalorder %s354, 31
        %s356 = scalar_select %p355, %s354, 31
        %s357 = smul.addr %s356, 4
        %s358 = scalar_lea.vmem %s2, %s357
        %p359 = pneg %p103
        %p360 = pneg %p100
        %p361 = pneg %p124
        %p362 = pneg %p121
        %p363 = pneg %p145
        %p364 = pneg %p142
        %p365 = pneg %p171
        %p366 = pneg %p168
        %s367 = smul.u32 16, %s20
        %p368 = scmp.lt.s32.totalorder %s367, 31
        %s369 = scalar_select %p368, %s367, 31
        %s370 = smul.addr %s369, 8
        %s371 = scalar_lea.vmem %s5, %s370
        %s372 = smul.u32 16, %s20
        %s373 = smul.u32 16, %s21
        %p374 = scmp.lt.s32.totalorder %s373, 31
        %s375 = scalar_select %p374, %s373, 31
        %s376 = smul.addr %s375, 4
        %s377 = scalar_lea.vmem %s1, %s376
        %s378 = smul.u32 16, %s21
        %s379 = smul.u32 16, %s20
        %p380 = scmp.lt.s32.totalorder %s379, 31
        %s381 = scalar_select %p380, %s379, 31
        %s382 = smul.addr %s381, 4
        %s383 = scalar_lea.vmem %s2, %s382
        %s384 = smul.u32 16, %s20
        %s385 = smul.u32 16, %s20
        %p386 = scmp.lt.s32.totalorder %s385, 31
        %s387 = scalar_select %p386, %s385, 31
        %s388 = smul.addr %s387, 8
        %s389 = scalar_lea.vmem %s5, %s388
        %s390 = smul.u32 16, %s20
        %p392 = scmp.eq.s32.totalorder %s21, 0
        // Predicated region
        $region82: #{tagraph_forward.5} parent=76 // pred_check
          %p393 = pneg %p392
        $region83: #{tagraph_forward.5} parent=76 // pred_check_branch
          %395 = sbr.rel (%p393) target = $region85
        $region84: #{tagraph_forward.5} parent=76 // pred_region
          %v396 = vld [vmem:[%s383] sm:$0xf]
          %v397 = vld [vmem:[%s383 + $0x4] sm:$0xf]
          %v398 = vld [vmem:[%s383 + $0x8] sm:$0xf]
          %v399 = vld [vmem:[%s383 + $0xc] sm:$0xf]
          %v400 = vld [vmem:[%s383 + $0x10] sm:$0xf]
          %v401 = vld [vmem:[%s383 + $0x14] sm:$0xf]
          %v402 = vld [vmem:[%s383 + $0x18] sm:$0xf]
          %v403 = vld [vmem:[%s383 + $0x1c] sm:$0xf]
          %v404 = vld [vmem:[%s383 + $0x20] sm:$0xf]
          %v405 = vld [vmem:[%s383 + $0x24] sm:$0xf]
          %v406 = vld [vmem:[%s383 + $0x28] sm:$0xf]
          %v407 = vld [vmem:[%s383 + $0x2c] sm:$0xf]
          %v408 = vld [vmem:[%s383 + $0x30] sm:$0xf]
          %v409 = vld [vmem:[%s383 + $0x34] sm:$0xf]
          %v410 = vld [vmem:[%s383 + $0x38] sm:$0xf]
          %v411 = vld [vmem:[%s383 + $0x3c] sm:$0xf]
          %v412 = vld [vmem:[%s3] sm:$0xf]
          %v413 = vld [vmem:[%s3 + $0x4] sm:$0xf]
          %v414 = vld [vmem:[%s3 + $0x8] sm:$0xf]
          %v415 = vld [vmem:[%s3 + $0xc] sm:$0xf]
          %v416 = vld [vmem:[%s4] sm:$0x1]
          %v418 = vperm.slane %v416, 0
          %v436 = vunpack.c.l.b16 %v396
          %v437 = vunpack.c.l.b16 %v397
          %v438 = vunpack.c.l.b16 %v398
          %v439 = vunpack.c.l.b16 %v399
          %v440 = vunpack.c.l.b16 %v400
          %v441 = vunpack.c.l.b16 %v401
          %v442 = vunpack.c.l.b16 %v402
          %v443 = vunpack.c.l.b16 %v403
          %v444 = vunpack.c.l.b16 %v404
          %v445 = vunpack.c.l.b16 %v405
          %v446 = vunpack.c.l.b16 %v406
          %v447 = vunpack.c.l.b16 %v407
          %v448 = vunpack.c.l.b16 %v408
          %v449 = vunpack.c.l.b16 %v409
          %v450 = vunpack.c.l.b16 %v410
          %v451 = vunpack.c.l.b16 %v411
          %v452 = vpack.c.b16 %v437, %v436
          %v453 = vpack.c.b16 %v439, %v438
          %v454 = vpack.c.b16 %v441, %v440
          %v455 = vpack.c.b16 %v443, %v442
          %v456 = vpack.c.b16 %v445, %v444
          %v457 = vpack.c.b16 %v447, %v446
          %v458 = vpack.c.b16 %v449, %v448
          %v459 = vpack.c.b16 %v451, %v450
          %v464 = vunpack.c.l.b16 %v412
          %v465 = vunpack.c.l.b16 %v413
          %v466 = vunpack.c.l.b16 %v414
          %v467 = vunpack.c.l.b16 %v415
          %v468 = vpack.c.b16 %v465, %v464
          %v469 = vpack.c.b16 %v467, %v466
          %vm472 = vcmask 261120
          %v474 = vsel %vm472, %v452, 0
          %v477 = vsel %vm472, %v453, 0
          %v480 = vsel %vm472, %v454, 0
          %v483 = vsel %vm472, %v455, 0
          %v486 = vsel %vm472, %v456, 0
          %v489 = vsel %vm472, %v457, 0
          %v492 = vsel %vm472, %v458, 0
          %v495 = vsel %vm472, %v459, 0
          %497 = vmatpush.bf16.msra.mxu0 0
          %498 = vmatpush.bf16.msra.mxu0 0
          %499 = vmatpush.bf16.msra.mxu0 0
          %500 = vmatpush.bf16.msra.mxu0 0
          %501 = vmatpush.bf16.msra.mxu0 0
          %502 = vmatpush.bf16.msra.mxu0 0
          %503 = vmatpush.bf16.msra.mxu0 %v469
          %504 = vmatpush.bf16.msra.mxu0 %v468
          %505 = vmatmul.bf16.gmra.mxu0 %v474
          %v506 = vpop.f32.mrf.mxu0
          %v507 = vadd.f32 %v418, %v506
          %v508 = vpop.f32.mrf.mxu0
          %v509 = vadd.f32 %v418, %v508
          %510 = vmatmul.bf16.gmra.mxu0 %v477
          %v511 = vpop.f32.mrf.mxu0
          %v512 = vadd.f32 %v418, %v511
          %v513 = vpop.f32.mrf.mxu0
          %v514 = vadd.f32 %v418, %v513
          %515 = vmatmul.bf16.gmra.mxu0 %v480
          %v516 = vpop.f32.mrf.mxu0
          %v517 = vadd.f32 %v418, %v516
          %v518 = vpop.f32.mrf.mxu0
          %v519 = vadd.f32 %v418, %v518
          %520 = vmatmul.bf16.gmra.mxu0 %v483
          %v521 = vpop.f32.mrf.mxu0
          %v522 = vadd.f32 %v418, %v521
          %v523 = vpop.f32.mrf.mxu0
          %v524 = vadd.f32 %v418, %v523
          %525 = vmatmul.bf16.gmra.mxu0 %v486
          %v526 = vpop.f32.mrf.mxu0
          %v527 = vadd.f32 %v418, %v526
          %v528 = vpop.f32.mrf.mxu0
          %v529 = vadd.f32 %v418, %v528
          %530 = vmatmul.bf16.gmra.mxu0 %v489
          %v531 = vpop.f32.mrf.mxu0
          %v532 = vadd.f32 %v418, %v531
          %v533 = vpop.f32.mrf.mxu0
          %v534 = vadd.f32 %v418, %v533
          %535 = vmatmul.bf16.gmra.mxu0 %v492
          %v536 = vpop.f32.mrf.mxu0
          %v537 = vadd.f32 %v418, %v536
          %v538 = vpop.f32.mrf.mxu0
          %v539 = vadd.f32 %v418, %v538
          %540 = vmatmul.bf16.gmra.mxu0 %v495
          %v541 = vpop.f32.mrf.mxu0
          %v542 = vadd.f32 %v418, %v541
          %v543 = vpop.f32.mrf.mxu0
          %v544 = vadd.f32 %v418, %v543
          %545 = vdwg.mxu0
          %546 = vst [vmem:[#allocation2] sm:$0xff] %v507
          %547 = vst [vmem:[#allocation2 + $0x8] sm:$0xff] %v509
          %548 = vst [vmem:[#allocation2 + $0x10] sm:$0xff] %v512
          %549 = vst [vmem:[#allocation2 + $0x18] sm:$0xff] %v514
          %550 = vst [vmem:[#allocation2 + $0x20] sm:$0xff] %v517
          %551 = vst [vmem:[#allocation2 + $0x28] sm:$0xff] %v519
          %552 = vst [vmem:[#allocation2 + $0x30] sm:$0xff] %v522
          %553 = vst [vmem:[#allocation2 + $0x38] sm:$0xff] %v524
          %554 = vst [vmem:[#allocation2 + $0x40] sm:$0xff] %v527
          %555 = vst [vmem:[#allocation2 + $0x48] sm:$0xff] %v529
          %556 = vst [vmem:[#allocation2 + $0x50] sm:$0xff] %v532
          %557 = vst [vmem:[#allocation2 + $0x58] sm:$0xff] %v534
          %558 = vst [vmem:[#allocation2 + $0x60] sm:$0xff] %v537
          %559 = vst [vmem:[#allocation2 + $0x68] sm:$0xff] %v539
          %560 = vst [vmem:[#allocation2 + $0x70] sm:$0xff] %v542
          %561 = vst [vmem:[#allocation2 + $0x78] sm:$0xff] %v544
        $region85: #{tagraph_forward.5} parent=76 // pred_fallthru
          _
        %v562 = vld [vmem:[#allocation2] sm:$0xff]
        %v563 = vld [vmem:[#allocation2 + $0x8] sm:$0xff]
        %v564 = vld [vmem:[#allocation2 + $0x10] sm:$0xff]
        %v565 = vld [vmem:[#allocation2 + $0x18] sm:$0xff]
        %v566 = vld [vmem:[#allocation2 + $0x20] sm:$0xff]
        %v567 = vld [vmem:[#allocation2 + $0x28] sm:$0xff]
        %v568 = vld [vmem:[#allocation2 + $0x30] sm:$0xff]
        %v569 = vld [vmem:[#allocation2 + $0x38] sm:$0xff]
        %v570 = vld [vmem:[#allocation2 + $0x40] sm:$0xff]
        %v571 = vld [vmem:[#allocation2 + $0x48] sm:$0xff]
        %v572 = vld [vmem:[#allocation2 + $0x50] sm:$0xff]
        %v573 = vld [vmem:[#allocation2 + $0x58] sm:$0xff]
        %v574 = vld [vmem:[#allocation2 + $0x60] sm:$0xff]
        %v575 = vld [vmem:[#allocation2 + $0x68] sm:$0xff]
        %v576 = vld [vmem:[#allocation2 + $0x70] sm:$0xff]
        %v577 = vld [vmem:[#allocation2 + $0x78] sm:$0xff]
        %v578 = vld [vmem:[%s337] sm:$0xf]
        %v579 = vld [vmem:[%s337 + $0x4] sm:$0xf]
        %v580 = vld [vmem:[%s337 + $0x8] sm:$0xf]
        %v581 = vld [vmem:[%s337 + $0xc] sm:$0xf]
        %v582 = vld [vmem:[%s337 + $0x10] sm:$0xf]
        %v583 = vld [vmem:[%s337 + $0x14] sm:$0xf]
        %v584 = vld [vmem:[%s337 + $0x18] sm:$0xf]
        %v585 = vld [vmem:[%s337 + $0x1c] sm:$0xf]
        %v586 = vld [vmem:[%s337 + $0x20] sm:$0xf]
        %v587 = vld [vmem:[%s337 + $0x24] sm:$0xf]
        %v588 = vld [vmem:[%s337 + $0x28] sm:$0xf]
        %v589 = vld [vmem:[%s337 + $0x2c] sm:$0xf]
        %v590 = vld [vmem:[%s337 + $0x30] sm:$0xf]
        %v591 = vld [vmem:[%s337 + $0x34] sm:$0xf]
        %v592 = vld [vmem:[%s337 + $0x38] sm:$0xf]
        %v593 = vld [vmem:[%s337 + $0x3c] sm:$0xf]
        %v594 = vld [vmem:[%s377] sm:$0xf]
        %v595 = vld [vmem:[%s377 + $0x4] sm:$0xf]
        %v596 = vld [vmem:[%s377 + $0x8] sm:$0xf]
        %v597 = vld [vmem:[%s377 + $0xc] sm:$0xf]
        %v598 = vld [vmem:[%s377 + $0x10] sm:$0xf]
        %v599 = vld [vmem:[%s377 + $0x14] sm:$0xf]
        %v600 = vld [vmem:[%s377 + $0x18] sm:$0xf]
        %v601 = vld [vmem:[%s377 + $0x1c] sm:$0xf]
        %v602 = vld [vmem:[%s377 + $0x20] sm:$0xf]
        %v603 = vld [vmem:[%s377 + $0x24] sm:$0xf]
        %v604 = vld [vmem:[%s377 + $0x28] sm:$0xf]
        %v605 = vld [vmem:[%s377 + $0x2c] sm:$0xf]
        %v606 = vld [vmem:[%s377 + $0x30] sm:$0xf]
        %v607 = vld [vmem:[%s377 + $0x34] sm:$0xf]
        %v608 = vld [vmem:[%s377 + $0x38] sm:$0xf]
        %v609 = vld [vmem:[%s377 + $0x3c] sm:$0xf]
        %v626 = vunpack.c.l.b16 %v578
        %v627 = vunpack.c.l.b16 %v579
        %v628 = vunpack.c.l.b16 %v580
        %v629 = vunpack.c.l.b16 %v581
        %v630 = vunpack.c.l.b16 %v582
        %v631 = vunpack.c.l.b16 %v583
        %v632 = vunpack.c.l.b16 %v584
        %v633 = vunpack.c.l.b16 %v585
        %v634 = vunpack.c.l.b16 %v586
        %v635 = vunpack.c.l.b16 %v587
        %v636 = vunpack.c.l.b16 %v588
        %v637 = vunpack.c.l.b16 %v589
        %v638 = vunpack.c.l.b16 %v590
        %v639 = vunpack.c.l.b16 %v591
        %v640 = vunpack.c.l.b16 %v592
        %v641 = vunpack.c.l.b16 %v593
        %v642 = vpack.c.b16 %v627, %v626
        %v643 = vpack.c.b16 %v629, %v628
        %v644 = vpack.c.b16 %v631, %v630
        %v645 = vpack.c.b16 %v633, %v632
        %v646 = vpack.c.b16 %v635, %v634
        %v647 = vpack.c.b16 %v637, %v636
        %v648 = vpack.c.b16 %v639, %v638
        %v649 = vpack.c.b16 %v641, %v640
        %v674 = vunpack.c.l.b16 %v594
        %v675 = vunpack.c.l.b16 %v595
        %v676 = vunpack.c.l.b16 %v596
        %v677 = vunpack.c.l.b16 %v597
        %v678 = vunpack.c.l.b16 %v598
        %v679 = vunpack.c.l.b16 %v599
        %v680 = vunpack.c.l.b16 %v600
        %v681 = vunpack.c.l.b16 %v601
        %v682 = vunpack.c.l.b16 %v602
        %v683 = vunpack.c.l.b16 %v603
        %v684 = vunpack.c.l.b16 %v604
        %v685 = vunpack.c.l.b16 %v605
        %v686 = vunpack.c.l.b16 %v606
        %v687 = vunpack.c.l.b16 %v607
        %v688 = vunpack.c.l.b16 %v608
        %v689 = vunpack.c.l.b16 %v609
        %v690 = vpack.c.b16 %v675, %v674
        %v691 = vpack.c.b16 %v677, %v676
        %v692 = vpack.c.b16 %v679, %v678
        %v693 = vpack.c.b16 %v681, %v680
        %v694 = vpack.c.b16 %v683, %v682
        %v695 = vpack.c.b16 %v685, %v684
        %v696 = vpack.c.b16 %v687, %v686
        %v697 = vpack.c.b16 %v689, %v688
        %706 = vmatpush.bf16.msra.mxu0 %v697
        %707 = vmatpush.bf16.msra.mxu0 %v696
        %708 = vmatpush.bf16.msra.mxu0 %v695
        %709 = vmatpush.bf16.msra.mxu0 %v694
        %710 = vmatpush.bf16.msra.mxu0 %v693
        %711 = vmatpush.bf16.msra.mxu0 %v692
        %712 = vmatpush.bf16.msra.mxu0 %v691
        %713 = vmatpush.bf16.msra.mxu0 %v690
        %714 = vmatmul.bf16.gmra.mxu0 %v642
        %v715 = vpop.f32.mrf.mxu0
        %v716 = vadd.f32 0.0, %v715
        %v717 = vpop.f32.mrf.mxu0
        %v718 = vadd.f32 0.0, %v717
        %719 = vmatmul.bf16.gmra.mxu0 %v643
        %v720 = vpop.f32.mrf.mxu0
        %v721 = vadd.f32 0.0, %v720
        %v722 = vpop.f32.mrf.mxu0
        %v723 = vadd.f32 0.0, %v722
        %724 = vmatmul.bf16.gmra.mxu0 %v644
        %v725 = vpop.f32.mrf.mxu0
        %v726 = vadd.f32 0.0, %v725
        %v727 = vpop.f32.mrf.mxu0
        %v728 = vadd.f32 0.0, %v727
        %729 = vmatmul.bf16.gmra.mxu0 %v645
        %v730 = vpop.f32.mrf.mxu0
        %v731 = vadd.f32 0.0, %v730
        %v732 = vpop.f32.mrf.mxu0
        %v733 = vadd.f32 0.0, %v732
        %734 = vmatmul.bf16.gmra.mxu0 %v646
        %v735 = vpop.f32.mrf.mxu0
        %v736 = vadd.f32 0.0, %v735
        %v737 = vpop.f32.mrf.mxu0
        %v738 = vadd.f32 0.0, %v737
        %739 = vmatmul.bf16.gmra.mxu0 %v647
        %v740 = vpop.f32.mrf.mxu0
        %v741 = vadd.f32 0.0, %v740
        %v742 = vpop.f32.mrf.mxu0
        %v743 = vadd.f32 0.0, %v742
        %744 = vmatmul.bf16.gmra.mxu0 %v648
        %v745 = vpop.f32.mrf.mxu0
        %v746 = vadd.f32 0.0, %v745
        %v747 = vpop.f32.mrf.mxu0
        %v748 = vadd.f32 0.0, %v747
        %749 = vmatmul.bf16.gmra.mxu0 %v649
        %v750 = vpop.f32.mrf.mxu0
        %v751 = vadd.f32 0.0, %v750
        %v752 = vpop.f32.mrf.mxu0
        %v753 = vadd.f32 0.0, %v752
        %754 = vdwg.mxu0
        %v755 = vadd.f32 %v562, %v716
        %v756 = vadd.f32 %v563, %v718
        %v757 = vadd.f32 %v564, %v721
        %v758 = vadd.f32 %v565, %v723
        %v759 = vadd.f32 %v566, %v726
        %v760 = vadd.f32 %v567, %v728
        %v761 = vadd.f32 %v568, %v731
        %v762 = vadd.f32 %v569, %v733
        %v763 = vadd.f32 %v570, %v736
        %v764 = vadd.f32 %v571, %v738
        %v765 = vadd.f32 %v572, %v741
        %v766 = vadd.f32 %v573, %v743
        %v767 = vadd.f32 %v574, %v746
        %v768 = vadd.f32 %v575, %v748
        %v769 = vadd.f32 %v576, %v751
        %v770 = vadd.f32 %v577, %v753
        %771 = vst [vmem:[#allocation2] sm:$0xff] %v755
        %772 = vst [vmem:[#allocation2 + $0x8] sm:$0xff] %v756
        %773 = vst [vmem:[#allocation2 + $0x10] sm:$0xff] %v757
        %774 = vst [vmem:[#allocation2 + $0x18] sm:$0xff] %v758
        %775 = vst [vmem:[#allocation2 + $0x20] sm:$0xff] %v759
        %776 = vst [vmem:[#allocation2 + $0x28] sm:$0xff] %v760
        %777 = vst [vmem:[#allocation2 + $0x30] sm:$0xff] %v761
        %778 = vst [vmem:[#allocation2 + $0x38] sm:$0xff] %v762
        %779 = vst [vmem:[#allocation2 + $0x40] sm:$0xff] %v763
        %780 = vst [vmem:[#allocation2 + $0x48] sm:$0xff] %v764
        %781 = vst [vmem:[#allocation2 + $0x50] sm:$0xff] %v765
        %782 = vst [vmem:[#allocation2 + $0x58] sm:$0xff] %v766
        %783 = vst [vmem:[#allocation2 + $0x60] sm:$0xff] %v767
        %784 = vst [vmem:[#allocation2 + $0x68] sm:$0xff] %v768
        %785 = vst [vmem:[#allocation2 + $0x70] sm:$0xff] %v769
        %786 = vst [vmem:[#allocation2 + $0x78] sm:$0xff] %v770
        %p787 = scmp.eq.s32.totalorder %s21, 1
        // Predicated region
        $region86: #{tagraph_forward.5} parent=76 // pred_check
          %p788 = pneg %p787
        $region87: #{tagraph_forward.5} parent=76 // pred_check_branch
          %790 = sbr.rel (%p788) target = $region89
        $region88: #{tagraph_forward.5} parent=76 // pred_region
          %v791 = vld [vmem:[#allocation2] sm:$0xff]
          %v792 = vld [vmem:[#allocation2 + $0x8] sm:$0xff]
          %v793 = vld [vmem:[#allocation2 + $0x10] sm:$0xff]
          %v794 = vld [vmem:[#allocation2 + $0x18] sm:$0xff]
          %v795 = vld [vmem:[#allocation2 + $0x20] sm:$0xff]
          %v796 = vld [vmem:[#allocation2 + $0x28] sm:$0xff]
          %v797 = vld [vmem:[#allocation2 + $0x30] sm:$0xff]
          %v798 = vld [vmem:[#allocation2 + $0x38] sm:$0xff]
          %v799 = vld [vmem:[#allocation2 + $0x40] sm:$0xff]
          %v800 = vld [vmem:[#allocation2 + $0x48] sm:$0xff]
          %v801 = vld [vmem:[#allocation2 + $0x50] sm:$0xff]
          %v802 = vld [vmem:[#allocation2 + $0x58] sm:$0xff]
          %v803 = vld [vmem:[#allocation2 + $0x60] sm:$0xff]
          %v804 = vld [vmem:[#allocation2 + $0x68] sm:$0xff]
          %v805 = vld [vmem:[#allocation2 + $0x70] sm:$0xff]
          %v806 = vld [vmem:[#allocation2 + $0x78] sm:$0xff]
          %807 = vst [vmem:[%s389] sm:$0xff] %v791
          %808 = vst [vmem:[%s389 + $0x8] sm:$0xff] %v792
          %809 = vst [vmem:[%s389 + $0x10] sm:$0xff] %v793
          %810 = vst [vmem:[%s389 + $0x18] sm:$0xff] %v794
          %811 = vst [vmem:[%s389 + $0x20] sm:$0xff] %v795
          %812 = vst [vmem:[%s389 + $0x28] sm:$0xff] %v796
          %813 = vst [vmem:[%s389 + $0x30] sm:$0xff] %v797
          %814 = vst [vmem:[%s389 + $0x38] sm:$0xff] %v798
          %815 = vst [vmem:[%s389 + $0x40] sm:$0xff] %v799
          %816 = vst [vmem:[%s389 + $0x48] sm:$0xff] %v800
          %817 = vst [vmem:[%s389 + $0x50] sm:$0xff] %v801
          %818 = vst [vmem:[%s389 + $0x58] sm:$0xff] %v802
          %819 = vst [vmem:[%s389 + $0x60] sm:$0xff] %v803
          %820 = vst [vmem:[%s389 + $0x68] sm:$0xff] %v804
          %821 = vst [vmem:[%s389 + $0x70] sm:$0xff] %v805
          %822 = vst [vmem:[%s389 + $0x78] sm:$0xff] %v806
        $region89: #{tagraph_forward.5} parent=76 // pred_fallthru
          _
        %s823 = smul.u32 16, %s20
        %p824 = scmp.lt.s32.totalorder %s823, 31
        %s825 = scalar_select %p824, %s823, 31
        %s826 = smul.addr %s825, 8
        %s827 = scalar_lea.vmem %s5, %s826
        // Predicated region
        $region90: #{tagraph_forward.5} parent=76 // pred_check
          %p828 = pneg %p168
        $region91: #{tagraph_forward.5} parent=76 // pred_check_branch
          %830 = sbr.rel (%p828) target = $region93
        $region92: #{tagraph_forward.5} parent=76 // pred_region
          %s831 = smul.u32 16, %s20
        $region93: #{tagraph_forward.5} parent=76 // pred_fallthru
          _
      $region77: #{tagraph_forward.5} parent=5 // pred_fallthru
        _
      %p832 = scmp.le.s32.totalorder 2, %s11
      // Predicated region
      $region94: #{tagraph_forward.5} parent=5 // pred_check
        %p833 = pneg %p832
      $region95: #{tagraph_forward.5} parent=5 // pred_check_branch
        %835 = sbr.rel (%p833) target = $region97
      $region96: #{tagraph_forward.5} parent=5 // pred_region
        %s836 = ssub.s32 %s11, 2
        // Predicated region
        $region98: #{tagraph_forward.5} parent=96 // pred_check
          %p837 = pneg %p174
        $region99: #{tagraph_forward.5} parent=96 // pred_check_branch
          %839 = sbr.rel (%p837) target = $region101
        $region100: #{tagraph_forward.5} parent=96 // pred_region
          %s840 = smul.u32 16, %s22
          %p841 = scmp.lt.s32.totalorder %s840, 31
          %s842 = scalar_select %p841, %s840, 31
          %s843 = smul.addr %s842, 8
          %s844 = scalar_lea.vmem %s5, %s843
        $region101: #{tagraph_forward.5} parent=96 // pred_fallthru
          _
      $region97: #{tagraph_forward.5} parent=5 // pred_fallthru
        _
    $region6: #{tagraph_forward.5} parent=1 // loop_footer
      %s15 = sadd.s32 1, %s11
    $region7: #{tagraph_forward.5} parent=1 // loop_footer_branch
      %10 = sbr.rel target = $region3
    $region8: #{tagraph_forward.5} parent=1 // loop_exit
      _

// kernel: tagraph_forward.4
$region0: #{tagraph_forward.4}
  #allocation0 [shape = 'u32[]', space=smem, size = 0x4, offset = 0x4, fixed_abs, tag = 'smem constant byte address 0x4 - core index']
  #allocation1 [shape = 'u32[72,128]{1,0:T(1,128)}', space=vmem, size = 0x9000, scoped, tag = 'internal scratch']
  #allocation2 [shape = 'f32[128,128]{1,0:T(8,128)}', space=vmem, size = 0x10000, scoped, tag = 'scratch operand']
  %s0 = inlined_call_operand.vmem [shape: bf16[256,256], index: 0, kind: input, shape index: {}]
  %s1 = inlined_call_operand.vmem [shape: bf16[256,128], index: 1, kind: input, shape index: {}]
  %s2 = inlined_call_operand.vmem [shape: bf16[256,32], index: 2, kind: input, shape index: {}]
  %s3 = inlined_call_operand.vmem [shape: bf16[32,128], index: 3, kind: input, shape index: {}]
  %s4 = inlined_call_operand.vmem [shape: f32[1,128], index: 4, kind: input, shape index: {}]
  %s5 = inlined_call_operand.vmem [shape: bf16[256,128], index: 5, kind: output, shape index: {}]
  %s6 = sld [smem:[#allocation0]]
  $region102: #{tagraph_forward.4} parent=0
    _
  %s8 = ssub.s32 1, %s6
  %s9 = scalar_select 0, %s8, %s6
  $region1: #{tagraph_forward.4} parent=0
    #allocation3 [shape = 'u8[65536]{0}', space=vmem, size = 0x10000, scoped, tag = 'input window, operand 0']
    loop: start=0, step=1, limit=6
    $region2: #{tagraph_forward.4} parent=1 // loop_pre_header
      _
    $region3: #{tagraph_forward.4} parent=1 // loop_header
      %s11 = sphi 0, %s15
      %p12 = scmp.ge.s32.totalorder %s11, 6
      %s18 = sphi 0, %s30
      %s19 = sphi 0, %s26
      %s20 = sphi 0, %s18
      %s21 = sphi 0, %s19
      %s22 = sphi 0, %s20
      %s23 = sphi 0, %s21
      %s35 = sphi 0, %s37
      %s38 = sphi 0, %s35
      %s39 = sphi 0, %s38
      %s55 = sphi 0, %s39
      %s61 = sphi 0, %s63
      %s64 = sphi 0, %s61
      %s65 = sphi 0, %s64
      %s81 = sphi 0, %s65
      %s87 = sphi 0, %s89
      %s90 = sphi 0, %s87
      %s91 = sphi 0, %s90
      %s107 = sphi 0, %s91
      %s111 = sphi 0, %s111
      %s113 = sphi 0, %s111
      %s114 = sphi 0, %s113
      %s128 = sphi 0, %s114
      %s132 = sphi 0, %s132
      %s134 = sphi 0, %s132
      %s135 = sphi 0, %s134
      %s149 = sphi 0, %s135
      %s155 = sphi 0, %s157
      %s158 = sphi 0, %s155
      %s159 = sphi 0, %s158
      %s175 = sphi 0, %s159
    $region4: #{tagraph_forward.4} parent=1 // loop_header_branch
      %14 = sbr.rel (%p12) target = $region8
    $region5: #{tagraph_forward.4} parent=1 // loop_body
      %s16 = ssub.s32 %s11, 1
      %s17 = ssub.s32 %s11, 2
      %s24 = sadd.s32 1, %s19
      %p25 = scmp.ge.s32.totalorder %s24, 2
      %s26 = scalar_select %p25, 0, %s24
      %s27 = sadd.s32 1, %s18
      %s28 = scalar_select %p25, %s27, %s18
      %p29 = scmp.ge.s32.totalorder %s28, 2
      %s30 = scalar_select %p29, 0, %s28
      %s31 = ssub.s32 %s18, %s30
      %s32 = ssub.s32 %s19, %s26
      %s33 = sor.u32 %s31, %s32
      %p34 = scmp.eq.s32.totalorder %s33, 0
      %s36 = sadd.s32 %s35, 1
      %s37 = scalar_select %p34, %s35, %s36
      %p40 = pneg %p34
      %p41 = scmp.eq.s32.totalorder %s11, 3
      %p42 = por %p40, %p41
      %p43 = scmp.ne.s32.totalorder %s35, %s38
      %p44 = scmp.eq.s32.totalorder %s11, 0
      %p45 = por %p43, %p44
      %p46 = scmp.ne.s32.totalorder %s35, %s38
      %p47 = scmp.eq.s32.totalorder %s16, 3
      %p48 = por %p46, %p47
      %p49 = scmp.ne.s32.totalorder %s38, %s39
      %p50 = scmp.eq.s32.totalorder %s16, 0
      %p51 = por %p49, %p50
      %p52 = scmp.ne.s32.totalorder %s38, %s39
      %p53 = scmp.eq.s32.totalorder %s17, 3
      %p54 = por %p52, %p53
      %p56 = scmp.ne.s32.totalorder %s39, %s55
      %p57 = scmp.eq.s32.totalorder %s17, 0
      %p58 = por %p56, %p57
      %s59 = ssub.s32 %s19, %s26
      %p60 = scmp.eq.s32.totalorder %s59, 0
      %s62 = sadd.s32 %s61, 1
      %s63 = scalar_select %p60, %s61, %s62
      %p66 = pneg %p60
      %p67 = scmp.eq.s32.totalorder %s11, 3
      %p68 = por %p66, %p67
      %p69 = scmp.ne.s32.totalorder %s61, %s64
      %p70 = scmp.eq.s32.totalorder %s11, 0
      %p71 = por %p69, %p70
      %p72 = scmp.ne.s32.totalorder %s61, %s64
      %p73 = scmp.eq.s32.totalorder %s16, 3
      %p74 = por %p72, %p73
      %p75 = scmp.ne.s32.totalorder %s64, %s65
      %p76 = scmp.eq.s32.totalorder %s16, 0
      %p77 = por %p75, %p76
      %p78 = scmp.ne.s32.totalorder %s64, %s65
      %p79 = scmp.eq.s32.totalorder %s17, 3
      %p80 = por %p78, %p79
      %p82 = scmp.ne.s32.totalorder %s65, %s81
      %p83 = scmp.eq.s32.totalorder %s17, 0
      %p84 = por %p82, %p83
      %s85 = ssub.s32 %s18, %s30
      %p86 = scmp.eq.s32.totalorder %s85, 0
      %s88 = sadd.s32 %s87, 1
      %s89 = scalar_select %p86, %s87, %s88
      %p92 = pneg %p86
      %p93 = scmp.eq.s32.totalorder %s11, 3
      %p94 = por %p92, %p93
      %p95 = scmp.ne.s32.totalorder %s87, %s90
      %p96 = scmp.eq.s32.totalorder %s11, 0
      %p97 = por %p95, %p96
      %p98 = scmp.ne.s32.totalorder %s87, %s90
      %p99 = scmp.eq.s32.totalorder %s16, 3
      %p100 = por %p98, %p99
      %p101 = scmp.ne.s32.totalorder %s90, %s91
      %p102 = scmp.eq.s32.totalorder %s16, 0
      %p103 = por %p101, %p102
      %p104 = scmp.ne.s32.totalorder %s90, %s91
      %p105 = scmp.eq.s32.totalorder %s17, 3
      %p106 = por %p104, %p105
      %p108 = scmp.ne.s32.totalorder %s91, %s107
      %p109 = scmp.eq.s32.totalorder %s17, 0
      %p110 = por %p108, %p109
      %s112 = sadd.s32 %s111, 1
      %p115 = scmp.eq.s32.totalorder %s11, 3
      %p116 = scmp.ne.s32.totalorder %s111, %s113
      %p117 = scmp.eq.s32.totalorder %s11, 0
      %p118 = por %p116, %p117
      %p119 = scmp.ne.s32.totalorder %s111, %s113
      %p120 = scmp.eq.s32.totalorder %s16, 3
      %p121 = por %p119, %p120
      %p122 = scmp.ne.s32.totalorder %s113, %s114
      %p123 = scmp.eq.s32.totalorder %s16, 0
      %p124 = por %p122, %p123
      %p125 = scmp.ne.s32.totalorder %s113, %s114
      %p126 = scmp.eq.s32.totalorder %s17, 3
      %p127 = por %p125, %p126
      %p129 = scmp.ne.s32.totalorder %s114, %s128
      %p130 = scmp.eq.s32.totalorder %s17, 0
      %p131 = por %p129, %p130
      %s133 = sadd.s32 %s132, 1
      %p136 = scmp.eq.s32.totalorder %s11, 3
      %p137 = scmp.ne.s32.totalorder %s132, %s134
      %p138 = scmp.eq.s32.totalorder %s11, 0
      %p139 = por %p137, %p138
      %p140 = scmp.ne.s32.totalorder %s132, %s134
      %p141 = scmp.eq.s32.totalorder %s16, 3
      %p142 = por %p140, %p141
      %p143 = scmp.ne.s32.totalorder %s134, %s135
      %p144 = scmp.eq.s32.totalorder %s16, 0
      %p145 = por %p143, %p144
      %p146 = scmp.ne.s32.totalorder %s134, %s135
      %p147 = scmp.eq.s32.totalorder %s17, 3
      %p148 = por %p146, %p147
      %p150 = scmp.ne.s32.totalorder %s135, %s149
      %p151 = scmp.eq.s32.totalorder %s17, 0
      %p152 = por %p150, %p151
      %s153 = ssub.s32 %s18, %s30
      %p154 = scmp.eq.s32.totalorder %s153, 0
      %s156 = sadd.s32 %s155, 1
      %s157 = scalar_select %p154, %s155, %s156
      %p160 = pneg %p154
      %p161 = scmp.eq.s32.totalorder %s11, 3
      %p162 = por %p160, %p161
      %p163 = scmp.ne.s32.totalorder %s155, %s158
      %p164 = scmp.eq.s32.totalorder %s11, 0
      %p165 = por %p163, %p164
      %p166 = scmp.ne.s32.totalorder %s155, %s158
      %p167 = scmp.eq.s32.totalorder %s16, 3
      %p168 = por %p166, %p167
      %p169 = scmp.ne.s32.totalorder %s158, %s159
      %p170 = scmp.eq.s32.totalorder %s16, 0
      %p171 = por %p169, %p170
      %p172 = scmp.ne.s32.totalorder %s158, %s159
      %p173 = scmp.eq.s32.totalorder %s17, 3
      %p174 = por %p172, %p173
      %p176 = scmp.ne.s32.totalorder %s159, %s175
      %p177 = scmp.eq.s32.totalorder %s17, 0
      %p178 = por %p176, %p177
      %p179 = scmp.le.s32.totalorder 1, %s11
      %p180 = scmp.lt.s32.totalorder %s11, 5
      %p181 = pnand %p179, %p180
      %p182 = pneg %p181
      // Predicated region
      $region9: #{tagraph_forward.4} parent=5 // pred_check
        _
      $region10: #{tagraph_forward.4} parent=5 // pred_check_branch
        %184 = sbr.rel (%p181) target = $region12
      $region11: #{tagraph_forward.4} parent=5 // pred_region
        %s185 = ssub.s32 %s11, 1
        // Predicated region
        $region13: #{tagraph_forward.4} parent=11 // pred_check
          %p186 = pneg %p124
        $region14: #{tagraph_forward.4} parent=11 // pred_check_branch
          %188 = sbr.rel (%p186) target = $region16
        $region15: #{tagraph_forward.4} parent=11 // pred_region
          _
        $region16: #{tagraph_forward.4} parent=11 // pred_fallthru
          _
        // Predicated region
        $region17: #{tagraph_forward.4} parent=11 // pred_check
          %p189 = pneg %p145
        $region18: #{tagraph_forward.4} parent=11 // pred_check_branch
          %191 = sbr.rel (%p189) target = $region20
        $region19: #{tagraph_forward.4} parent=11 // pred_region
          _
        $region20: #{tagraph_forward.4} parent=11 // pred_fallthru
          _
      $region12: #{tagraph_forward.4} parent=5 // pred_fallthru
        _
      %p192 = scmp.lt.s32.totalorder %s11, 4
      // Predicated region
      $region21: #{tagraph_forward.4} parent=5 // pred_check
        %p193 = pneg %p192
      $region22: #{tagraph_forward.4} parent=5 // pred_check_branch
        %195 = sbr.rel (%p193) target = $region24
      $region23: #{tagraph_forward.4} parent=5 // pred_region
        // Predicated region
        $region25: #{tagraph_forward.4} parent=23 // pred_check
          %p196 = pneg %p45
        $region26: #{tagraph_forward.4} parent=23 // pred_check_branch
          %198 = sbr.rel (%p196) target = $region28
        $region27: #{tagraph_forward.4} parent=23 // pred_region
          %s199 = sand.u32 %s35, 1
          %s200 = sand.u32 %s35, 1
          %s201 = smul.addr %s200, 64
          %s202 = scalar_lea.vmem [#allocation3], %s201
          %s203 = smul.u32 16, %s18
          %s204 = smul.addr %s203, 2
          %s205 = sadd.s32 %s19, %s204
          %s206 = smul.addr %s205, 4
          %s207 = scalar_lea.vmem %s0, %s206
          // Predicated region
          $region29: #{tagraph_forward.4} parent=27 // pred_check
            _
          $region30: #{tagraph_forward.4} parent=27 // pred_check_branch
            %209 = sbr.rel (0) target = $region32
          $region31: #{tagraph_forward.4} parent=27 // pred_region
            // Predicated region
            $region33: #{tagraph_forward.4} parent=31 // pred_check
              _
            $region34: #{tagraph_forward.4} parent=31 // pred_check_branch
              %211 = sbr.rel target = $region36
            $region35: #{tagraph_forward.4} parent=31 // pred_region
              // Predicated region
              $region48: #{tagraph_forward.4} parent=35 // pred_check
                _
              $region49: #{tagraph_forward.4} parent=35 // pred_check_branch
                %257 = sbr.rel (0) target = $region51
              $region50: #{tagraph_forward.4} parent=35 // pred_region
                loop: start=0, step=1, limit=1
                $region52: #{tagraph_forward.4} parent=50 // loop_pre_header
                  _
                $region53: #{tagraph_forward.4} parent=50 // loop_header
                  %s259 = sphi 0, %s263
                  %p260 = scmp.ge.s32.totalorder %s259, 1
                  %s264 = sphi %s207, %s207
                  %s265 = sphi %s202, %s202
                $region54: #{tagraph_forward.4} parent=50 // loop_header_branch
                  %262 = sbr.rel (%p260) target = $region58
                $region55: #{tagraph_forward.4} parent=50 // loop_body
                  _
                $region56: #{tagraph_forward.4} parent=50 // loop_footer
                  %s263 = sadd.s32 1, %s259
                $region57: #{tagraph_forward.4} parent=50 // loop_footer_branch
                  %258 = sbr.rel target = $region53
                $region58: #{tagraph_forward.4} parent=50 // loop_exit
                  _
                %s267 = ssub.s32 16, 1
                loop: start=0, step=1, limit=1
                $region59: #{tagraph_forward.4} parent=50 // loop_pre_header
                  _
                $region60: #{tagraph_forward.4} parent=50 // loop_header
                  %s269 = sphi 0, %s273
                  %p270 = scmp.ge.s32.totalorder %s269, 1
                  %s274 = sphi %s207, %s207
                  %s275 = sphi %s202, %s202
                $region61: #{tagraph_forward.4} parent=50 // loop_header_branch
                  %272 = sbr.rel (%p270) target = $region65
                $region62: #{tagraph_forward.4} parent=50 // loop_body
                  %v276 = vld [vmem:[%s274] sm:%s267]
                  %277 = vst [vmem:[%s275] sm:%s267] %v276
                  %v278 = vld [vmem:[%s274 + $0x8] sm:%s267]
                  %279 = vst [vmem:[%s275 + $0x4] sm:%s267] %v278
                  %v280 = vld [vmem:[%s274 + $0x10] sm:%s267]
                  %281 = vst [vmem:[%s275 + $0x8] sm:%s267] %v280
                  %v282 = vld [vmem:[%s274 + $0x18] sm:%s267]
                  %283 = vst [vmem:[%s275 + $0xc] sm:%s267] %v282
                  %v284 = vld [vmem:[%s274 + $0x20] sm:%s267]
                  %285 = vst [vmem:[%s275 + $0x10] sm:%s267] %v284
                  %v286 = vld [vmem:[%s274 + $0x28] sm:%s267]
                  %287 = vst [vmem:[%s275 + $0x14] sm:%s267] %v286
                  %v288 = vld [vmem:[%s274 + $0x30] sm:%s267]
                  %289 = vst [vmem:[%s275 + $0x18] sm:%s267] %v288
                  %v290 = vld [vmem:[%s274 + $0x38] sm:%s267]
                  %291 = vst [vmem:[%s275 + $0x1c] sm:%s267] %v290
                  %v292 = vld [vmem:[%s274 + $0x40] sm:%s267]
                  %293 = vst [vmem:[%s275 + $0x20] sm:%s267] %v292
                  %v294 = vld [vmem:[%s274 + $0x48] sm:%s267]
                  %295 = vst [vmem:[%s275 + $0x24] sm:%s267] %v294
                  %v296 = vld [vmem:[%s274 + $0x50] sm:%s267]
                  %297 = vst [vmem:[%s275 + $0x28] sm:%s267] %v296
                  %v298 = vld [vmem:[%s274 + $0x58] sm:%s267]
                  %299 = vst [vmem:[%s275 + $0x2c] sm:%s267] %v298
                  %v300 = vld [vmem:[%s274 + $0x60] sm:%s267]
                  %301 = vst [vmem:[%s275 + $0x30] sm:%s267] %v300
                  %v302 = vld [vmem:[%s274 + $0x68] sm:%s267]
                  %303 = vst [vmem:[%s275 + $0x34] sm:%s267] %v302
                  %v304 = vld [vmem:[%s274 + $0x70] sm:%s267]
                  %305 = vst [vmem:[%s275 + $0x38] sm:%s267] %v304
                  %v306 = vld [vmem:[%s274 + $0x78] sm:%s267]
                  %307 = vst [vmem:[%s275 + $0x3c] sm:%s267] %v306
                $region63: #{tagraph_forward.4} parent=50 // loop_footer
                  %s273 = sadd.s32 1, %s269
                $region64: #{tagraph_forward.4} parent=50 // loop_footer_branch
                  %268 = sbr.rel target = $region60
                $region65: #{tagraph_forward.4} parent=50 // loop_exit
                  _
              $region51: #{tagraph_forward.4} parent=35 // pred_fallthru
                _
            $region36: #{tagraph_forward.4} parent=31 // pred_fallthru
              _
            // Predicated region
            $region37: #{tagraph_forward.4} parent=31 // pred_check
              _
            $region38: #{tagraph_forward.4} parent=31 // pred_check_branch
              %213 = sbr.rel (0) target = $region40
            $region39: #{tagraph_forward.4} parent=31 // pred_region
              %s215 = ssub.s32 16, 1
              loop: start=0, step=1, limit=1
              $region41: #{tagraph_forward.4} parent=39 // loop_pre_header
                _
              $region42: #{tagraph_forward.4} parent=39 // loop_header
                %s217 = sphi 0, %s221
                %p218 = scmp.ge.s32.totalorder %s217, 1
                %s222 = sphi %s207, %s207
                %s223 = sphi %s202, %s202
              $region43: #{tagraph_forward.4} parent=39 // loop_header_branch
                %220 = sbr.rel (%p218) target = $region47
              $region44: #{tagraph_forward.4} parent=39 // loop_body
                %v224 = vld [vmem:[%s222] sm:%s215]
                %225 = vst [vmem:[%s223] sm:%s215] %v224
                %v226 = vld [vmem:[%s222 + $0x8] sm:%s215]
                %227 = vst [vmem:[%s223 + $0x4] sm:%s215] %v226
                %v228 = vld [vmem:[%s222 + $0x10] sm:%s215]
                %229 = vst [vmem:[%s223 + $0x8] sm:%s215] %v228
                %v230 = vld [vmem:[%s222 + $0x18] sm:%s215]
                %231 = vst [vmem:[%s223 + $0xc] sm:%s215] %v230
                %v232 = vld [vmem:[%s222 + $0x20] sm:%s215]
                %233 = vst [vmem:[%s223 + $0x10] sm:%s215] %v232
                %v234 = vld [vmem:[%s222 + $0x28] sm:%s215]
                %235 = vst [vmem:[%s223 + $0x14] sm:%s215] %v234
                %v236 = vld [vmem:[%s222 + $0x30] sm:%s215]
                %237 = vst [vmem:[%s223 + $0x18] sm:%s215] %v236
                %v238 = vld [vmem:[%s222 + $0x38] sm:%s215]
                %239 = vst [vmem:[%s223 + $0x1c] sm:%s215] %v238
                %v240 = vld [vmem:[%s222 + $0x40] sm:%s215]
                %241 = vst [vmem:[%s223 + $0x20] sm:%s215] %v240
                %v242 = vld [vmem:[%s222 + $0x48] sm:%s215]
                %243 = vst [vmem:[%s223 + $0x24] sm:%s215] %v242
                %v244 = vld [vmem:[%s222 + $0x50] sm:%s215]
                %245 = vst [vmem:[%s223 + $0x28] sm:%s215] %v244
                %v246 = vld [vmem:[%s222 + $0x58] sm:%s215]
                %247 = vst [vmem:[%s223 + $0x2c] sm:%s215] %v246
                %v248 = vld [vmem:[%s222 + $0x60] sm:%s215]
                %249 = vst [vmem:[%s223 + $0x30] sm:%s215] %v248
                %v250 = vld [vmem:[%s222 + $0x68] sm:%s215]
                %251 = vst [vmem:[%s223 + $0x34] sm:%s215] %v250
                %v252 = vld [vmem:[%s222 + $0x70] sm:%s215]
                %253 = vst [vmem:[%s223 + $0x38] sm:%s215] %v252
                %v254 = vld [vmem:[%s222 + $0x78] sm:%s215]
                %255 = vst [vmem:[%s223 + $0x3c] sm:%s215] %v254
              $region45: #{tagraph_forward.4} parent=39 // loop_footer
                %s221 = sadd.s32 1, %s217
              $region46: #{tagraph_forward.4} parent=39 // loop_footer_branch
                %216 = sbr.rel target = $region42
              $region47: #{tagraph_forward.4} parent=39 // loop_exit
                _
            $region40: #{tagraph_forward.4} parent=31 // pred_fallthru
              _
          $region32: #{tagraph_forward.4} parent=27 // pred_fallthru
            _
          %308 = vnop
        $region28: #{tagraph_forward.4} parent=23 // pred_fallthru
          _
        // Predicated region
        $region66: #{tagraph_forward.4} parent=23 // pred_check
          %p309 = pneg %p71
        $region67: #{tagraph_forward.4} parent=23 // pred_check_branch
          %311 = sbr.rel (%p309) target = $region69
        $region68: #{tagraph_forward.4} parent=23 // pred_region
          %s312 = smul.u32 16, %s19
          %p313 = scmp.lt.s32.totalorder %s312, 31
          %s314 = scalar_select %p313, %s312, 31
          %s315 = smul.addr %s314, 4
          %s316 = scalar_lea.vmem %s1, %s315
          %s317 = smul.u32 16, %s19
        $region69: #{tagraph_forward.4} parent=23 // pred_fallthru
          _
        // Predicated region
        $region70: #{tagraph_forward.4} parent=23 // pred_check
          %p318 = pneg %p97
        $region71: #{tagraph_forward.4} parent=23 // pred_check_branch
          %320 = sbr.rel (%p318) target = $region73
        $region72: #{tagraph_forward.4} parent=23 // pred_region
          %s321 = smul.u32 16, %s18
          %p322 = scmp.lt.s32.totalorder %s321, 31
          %s323 = scalar_select %p322, %s321, 31
          %s324 = smul.addr %s323, 4
          %s325 = scalar_lea.vmem %s2, %s324
          %s326 = smul.u32 16, %s18
        $region73: #{tagraph_forward.4} parent=23 // pred_fallthru
          _
      $region24: #{tagraph_forward.4} parent=5 // pred_fallthru
        _
      %p327 = scmp.le.s32.totalorder 1, %s11
      %p328 = scmp.lt.s32.totalorder %s11, 5
      %p329 = pnand %p327, %p328
      %p330 = pneg %p329
      // Predicated region
      $region74: #{tagraph_forward.4} parent=5 // pred_check
        _
      $region75: #{tagraph_forward.4} parent=5 // pred_check_branch
        %332 = sbr.rel (%p329) target = $region77
      $region76: #{tagraph_forward.4} parent=5 // pred_region
        %s333 = ssub.s32 %s11, 1
        %s334 = sand.u32 %s38, 1
        %s335 = sand.u32 %s38, 1
        %s336 = smul.addr %s335, 64
        %s337 = scalar_lea.vmem [#allocation3], %s336
        // Predicated region
        $region78: #{tagraph_forward.4} parent=76 // pred_check
          %p338 = pneg %p51
        $region79: #{tagraph_forward.4} parent=76 // pred_check_branch
          %340 = sbr.rel (%p338) target = $region81
        $region80: #{tagraph_forward.4} parent=76 // pred_region
          _
        $region81: #{tagraph_forward.4} parent=76 // pred_fallthru
          _
        %s341 = sand.u32 %s38, 1
        %s342 = sand.u32 %s38, 1
        %s343 = smul.addr %s342, 64
        %s344 = scalar_lea.vmem [#allocation3], %s343
        %p345 = pneg %p51
        %p346 = pneg %p48
        %s347 = smul.u32 16, %s21
        %p348 = scmp.lt.s32.totalorder %s347, 31
        %s349 = scalar_select %p348, %s347, 31
        %s350 = smul.addr %s349, 4
        %s351 = scalar_lea.vmem %s1, %s350
        %p352 = pneg %p77
        %p353 = pneg %p74
        %s354 = smul.u32 16, %s20
        %p355 = scmp.lt.s32.totalorder %s354, 31
        %s356 = scalar_select %p355, %s354, 31
        %s357 = smul.addr %s356, 4
        %s358 = scalar_lea.vmem %s2, %s357
        %p359 = pneg %p103
        %p360 = pneg %p100
        %p361 = pneg %p124
        %p362 = pneg %p121
        %p363 = pneg %p145
        %p364 = pneg %p142
        %p365 = pneg %p171
        %p366 = pneg %p168
        %s367 = smul.u32 16, %s20
        %p368 = scmp.lt.s32.totalorder %s367, 31
        %s369 = scalar_select %p368, %s367, 31
        %s370 = smul.addr %s369, 4
        %s371 = scalar_lea.vmem %s5, %s370
        %s372 = smul.u32 16, %s20
        %s373 = smul.u32 16, %s21
        %p374 = scmp.lt.s32.totalorder %s373, 31
        %s375 = scalar_select %p374, %s373, 31
        %s376 = smul.addr %s375, 4
        %s377 = scalar_lea.vmem %s1, %s376
        %s378 = smul.u32 16, %s21
        %s379 = smul.u32 16, %s20
        %p380 = scmp.lt.s32.totalorder %s379, 31
        %s381 = scalar_select %p380, %s379, 31
        %s382 = smul.addr %s381, 4
        %s383 = scalar_lea.vmem %s2, %s382
        %s384 = smul.u32 16, %s20
        %s385 = smul.u32 16, %s20
        %p386 = scmp.lt.s32.totalorder %s385, 31
        %s387 = scalar_select %p386, %s385, 31
        %s388 = smul.addr %s387, 4
        %s389 = scalar_lea.vmem %s5, %s388
        %s390 = smul.u32 16, %s20
        %p392 = scmp.eq.s32.totalorder %s21, 0
        // Predicated region
        $region82: #{tagraph_forward.4} parent=76 // pred_check
          %p393 = pneg %p392
        $region83: #{tagraph_forward.4} parent=76 // pred_check_branch
          %395 = sbr.rel (%p393) target = $region85
        $region84: #{tagraph_forward.4} parent=76 // pred_region
          %v396 = vld [vmem:[%s383] sm:$0xf]
          %v397 = vld [vmem:[%s383 + $0x4] sm:$0xf]
          %v398 = vld [vmem:[%s383 + $0x8] sm:$0xf]
          %v399 = vld [vmem:[%s383 + $0xc] sm:$0xf]
          %v400 = vld [vmem:[%s383 + $0x10] sm:$0xf]
          %v401 = vld [vmem:[%s383 + $0x14] sm:$0xf]
          %v402 = vld [vmem:[%s383 + $0x18] sm:$0xf]
          %v403 = vld [vmem:[%s383 + $0x1c] sm:$0xf]
          %v404 = vld [vmem:[%s383 + $0x20] sm:$0xf]
          %v405 = vld [vmem:[%s383 + $0x24] sm:$0xf]
          %v406 = vld [vmem:[%s383 + $0x28] sm:$0xf]
          %v407 = vld [vmem:[%s383 + $0x2c] sm:$0xf]
          %v408 = vld [vmem:[%s383 + $0x30] sm:$0xf]
          %v409 = vld [vmem:[%s383 + $0x34] sm:$0xf]
          %v410 = vld [vmem:[%s383 + $0x38] sm:$0xf]
          %v411 = vld [vmem:[%s383 + $0x3c] sm:$0xf]
          %v412 = vld [vmem:[%s3] sm:$0xf]
          %v413 = vld [vmem:[%s3 + $0x4] sm:$0xf]
          %v414 = vld [vmem:[%s3 + $0x8] sm:$0xf]
          %v415 = vld [vmem:[%s3 + $0xc] sm:$0xf]
          %v416 = vld [vmem:[%s4] sm:$0x1]
          %v418 = vperm.slane %v416, 0
          %v436 = vunpack.c.l.b16 %v396
          %v437 = vunpack.c.l.b16 %v397
          %v438 = vunpack.c.l.b16 %v398
          %v439 = vunpack.c.l.b16 %v399
          %v440 = vunpack.c.l.b16 %v400
          %v441 = vunpack.c.l.b16 %v401
          %v442 = vunpack.c.l.b16 %v402
          %v443 = vunpack.c.l.b16 %v403
          %v444 = vunpack.c.l.b16 %v404
          %v445 = vunpack.c.l.b16 %v405
          %v446 = vunpack.c.l.b16 %v406
          %v447 = vunpack.c.l.b16 %v407
          %v448 = vunpack.c.l.b16 %v408
          %v449 = vunpack.c.l.b16 %v409
          %v450 = vunpack.c.l.b16 %v410
          %v451 = vunpack.c.l.b16 %v411
          %v452 = vpack.c.b16 %v437, %v436
          %v453 = vpack.c.b16 %v439, %v438
          %v454 = vpack.c.b16 %v441, %v440
          %v455 = vpack.c.b16 %v443, %v442
          %v456 = vpack.c.b16 %v445, %v444
          %v457 = vpack.c.b16 %v447, %v446
          %v458 = vpack.c.b16 %v449, %v448
          %v459 = vpack.c.b16 %v451, %v450
          %v464 = vunpack.c.l.b16 %v412
          %v465 = vunpack.c.l.b16 %v413
          %v466 = vunpack.c.l.b16 %v414
          %v467 = vunpack.c.l.b16 %v415
          %v468 = vpack.c.b16 %v465, %v464
          %v469 = vpack.c.b16 %v467, %v466
          %vm472 = vcmask 261120
          %v474 = vsel %vm472, %v452, 0
          %v477 = vsel %vm472, %v453, 0
          %v480 = vsel %vm472, %v454, 0
          %v483 = vsel %vm472, %v455, 0
          %v486 = vsel %vm472, %v456, 0
          %v489 = vsel %vm472, %v457, 0
          %v492 = vsel %vm472, %v458, 0
          %v495 = vsel %vm472, %v459, 0
          %497 = vmatpush.bf16.msra.mxu0 0
          %498 = vmatpush.bf16.msra.mxu0 0
          %499 = vmatpush.bf16.msra.mxu0 0
          %500 = vmatpush.bf16.msra.mxu0 0
          %501 = vmatpush.bf16.msra.mxu0 0
          %502 = vmatpush.bf16.msra.mxu0 0
          %503 = vmatpush.bf16.msra.mxu0 %v469
          %504 = vmatpush.bf16.msra.mxu0 %v468
          %505 = vmatmul.bf16.gmra.mxu0 %v474
          %v506 = vpop.f32.mrf.mxu0
          %v507 = vadd.f32 %v418, %v506
          %v508 = vpop.f32.mrf.mxu0
          %v509 = vadd.f32 %v418, %v508
          %510 = vmatmul.bf16.gmra.mxu0 %v477
          %v511 = vpop.f32.mrf.mxu0
          %v512 = vadd.f32 %v418, %v511
          %v513 = vpop.f32.mrf.mxu0
          %v514 = vadd.f32 %v418, %v513
          %515 = vmatmul.bf16.gmra.mxu0 %v480
          %v516 = vpop.f32.mrf.mxu0
          %v517 = vadd.f32 %v418, %v516
          %v518 = vpop.f32.mrf.mxu0
          %v519 = vadd.f32 %v418, %v518
          %520 = vmatmul.bf16.gmra.mxu0 %v483
          %v521 = vpop.f32.mrf.mxu0
          %v522 = vadd.f32 %v418, %v521
          %v523 = vpop.f32.mrf.mxu0
          %v524 = vadd.f32 %v418, %v523
          %525 = vmatmul.bf16.gmra.mxu0 %v486
          %v526 = vpop.f32.mrf.mxu0
          %v527 = vadd.f32 %v418, %v526
          %v528 = vpop.f32.mrf.mxu0
          %v529 = vadd.f32 %v418, %v528
          %530 = vmatmul.bf16.gmra.mxu0 %v489
          %v531 = vpop.f32.mrf.mxu0
          %v532 = vadd.f32 %v418, %v531
          %v533 = vpop.f32.mrf.mxu0
          %v534 = vadd.f32 %v418, %v533
          %535 = vmatmul.bf16.gmra.mxu0 %v492
          %v536 = vpop.f32.mrf.mxu0
          %v537 = vadd.f32 %v418, %v536
          %v538 = vpop.f32.mrf.mxu0
          %v539 = vadd.f32 %v418, %v538
          %540 = vmatmul.bf16.gmra.mxu0 %v495
          %v541 = vpop.f32.mrf.mxu0
          %v542 = vadd.f32 %v418, %v541
          %v543 = vpop.f32.mrf.mxu0
          %v544 = vadd.f32 %v418, %v543
          %545 = vdwg.mxu0
          %546 = vst [vmem:[#allocation2] sm:$0xff] %v507
          %547 = vst [vmem:[#allocation2 + $0x8] sm:$0xff] %v509
          %548 = vst [vmem:[#allocation2 + $0x10] sm:$0xff] %v512
          %549 = vst [vmem:[#allocation2 + $0x18] sm:$0xff] %v514
          %550 = vst [vmem:[#allocation2 + $0x20] sm:$0xff] %v517
          %551 = vst [vmem:[#allocation2 + $0x28] sm:$0xff] %v519
          %552 = vst [vmem:[#allocation2 + $0x30] sm:$0xff] %v522
          %553 = vst [vmem:[#allocation2 + $0x38] sm:$0xff] %v524
          %554 = vst [vmem:[#allocation2 + $0x40] sm:$0xff] %v527
          %555 = vst [vmem:[#allocation2 + $0x48] sm:$0xff] %v529
          %556 = vst [vmem:[#allocation2 + $0x50] sm:$0xff] %v532
          %557 = vst [vmem:[#allocation2 + $0x58] sm:$0xff] %v534
          %558 = vst [vmem:[#allocation2 + $0x60] sm:$0xff] %v537
          %559 = vst [vmem:[#allocation2 + $0x68] sm:$0xff] %v539
          %560 = vst [vmem:[#allocation2 + $0x70] sm:$0xff] %v542
          %561 = vst [vmem:[#allocation2 + $0x78] sm:$0xff] %v544
        $region85: #{tagraph_forward.4} parent=76 // pred_fallthru
          _
        %v562 = vld [vmem:[#allocation2] sm:$0xff]
        %v563 = vld [vmem:[#allocation2 + $0x8] sm:$0xff]
        %v564 = vld [vmem:[#allocation2 + $0x10] sm:$0xff]
        %v565 = vld [vmem:[#allocation2 + $0x18] sm:$0xff]
        %v566 = vld [vmem:[#allocation2 + $0x20] sm:$0xff]
        %v567 = vld [vmem:[#allocation2 + $0x28] sm:$0xff]
        %v568 = vld [vmem:[#allocation2 + $0x30] sm:$0xff]
        %v569 = vld [vmem:[#allocation2 + $0x38] sm:$0xff]
        %v570 = vld [vmem:[#allocation2 + $0x40] sm:$0xff]
        %v571 = vld [vmem:[#allocation2 + $0x48] sm:$0xff]
        %v572 = vld [vmem:[#allocation2 + $0x50] sm:$0xff]
        %v573 = vld [vmem:[#allocation2 + $0x58] sm:$0xff]
        %v574 = vld [vmem:[#allocation2 + $0x60] sm:$0xff]
        %v575 = vld [vmem:[#allocation2 + $0x68] sm:$0xff]
        %v576 = vld [vmem:[#allocation2 + $0x70] sm:$0xff]
        %v577 = vld [vmem:[#allocation2 + $0x78] sm:$0xff]
        %v578 = vld [vmem:[%s337] sm:$0xf]
        %v579 = vld [vmem:[%s337 + $0x4] sm:$0xf]
        %v580 = vld [vmem:[%s337 + $0x8] sm:$0xf]
        %v581 = vld [vmem:[%s337 + $0xc] sm:$0xf]
        %v582 = vld [vmem:[%s337 + $0x10] sm:$0xf]
        %v583 = vld [vmem:[%s337 + $0x14] sm:$0xf]
        %v584 = vld [vmem:[%s337 + $0x18] sm:$0xf]
        %v585 = vld [vmem:[%s337 + $0x1c] sm:$0xf]
        %v586 = vld [vmem:[%s337 + $0x20] sm:$0xf]
        %v587 = vld [vmem:[%s337 + $0x24] sm:$0xf]
        %v588 = vld [vmem:[%s337 + $0x28] sm:$0xf]
        %v589 = vld [vmem:[%s337 + $0x2c] sm:$0xf]
        %v590 = vld [vmem:[%s337 + $0x30] sm:$0xf]
        %v591 = vld [vmem:[%s337 + $0x34] sm:$0xf]
        %v592 = vld [vmem:[%s337 + $0x38] sm:$0xf]
        %v593 = vld [vmem:[%s337 + $0x3c] sm:$0xf]
        %v594 = vld [vmem:[%s377] sm:$0xf]
        %v595 = vld [vmem:[%s377 + $0x4] sm:$0xf]
        %v596 = vld [vmem:[%s377 + $0x8] sm:$0xf]
        %v597 = vld [vmem:[%s377 + $0xc] sm:$0xf]
        %v598 = vld [vmem:[%s377 + $0x10] sm:$0xf]
        %v599 = vld [vmem:[%s377 + $0x14] sm:$0xf]
        %v600 = vld [vmem:[%s377 + $0x18] sm:$0xf]
        %v601 = vld [vmem:[%s377 + $0x1c] sm:$0xf]
        %v602 = vld [vmem:[%s377 + $0x20] sm:$0xf]
        %v603 = vld [vmem:[%s377 + $0x24] sm:$0xf]
        %v604 = vld [vmem:[%s377 + $0x28] sm:$0xf]
        %v605 = vld [vmem:[%s377 + $0x2c] sm:$0xf]
        %v606 = vld [vmem:[%s377 + $0x30] sm:$0xf]
        %v607 = vld [vmem:[%s377 + $0x34] sm:$0xf]
        %v608 = vld [vmem:[%s377 + $0x38] sm:$0xf]
        %v609 = vld [vmem:[%s377 + $0x3c] sm:$0xf]
        %v626 = vunpack.c.l.b16 %v578
        %v627 = vunpack.c.l.b16 %v579
        %v628 = vunpack.c.l.b16 %v580
        %v629 = vunpack.c.l.b16 %v581
        %v630 = vunpack.c.l.b16 %v582
        %v631 = vunpack.c.l.b16 %v583
        %v632 = vunpack.c.l.b16 %v584
        %v633 = vunpack.c.l.b16 %v585
        %v634 = vunpack.c.l.b16 %v586
        %v635 = vunpack.c.l.b16 %v587
        %v636 = vunpack.c.l.b16 %v588
        %v637 = vunpack.c.l.b16 %v589
        %v638 = vunpack.c.l.b16 %v590
        %v639 = vunpack.c.l.b16 %v591
        %v640 = vunpack.c.l.b16 %v592
        %v641 = vunpack.c.l.b16 %v593
        %v642 = vpack.c.b16 %v627, %v626
        %v643 = vpack.c.b16 %v629, %v628
        %v644 = vpack.c.b16 %v631, %v630
        %v645 = vpack.c.b16 %v633, %v632
        %v646 = vpack.c.b16 %v635, %v634
        %v647 = vpack.c.b16 %v637, %v636
        %v648 = vpack.c.b16 %v639, %v638
        %v649 = vpack.c.b16 %v641, %v640
        %v674 = vunpack.c.l.b16 %v594
        %v675 = vunpack.c.l.b16 %v595
        %v676 = vunpack.c.l.b16 %v596
        %v677 = vunpack.c.l.b16 %v597
        %v678 = vunpack.c.l.b16 %v598
        %v679 = vunpack.c.l.b16 %v599
        %v680 = vunpack.c.l.b16 %v600
        %v681 = vunpack.c.l.b16 %v601
        %v682 = vunpack.c.l.b16 %v602
        %v683 = vunpack.c.l.b16 %v603
        %v684 = vunpack.c.l.b16 %v604
        %v685 = vunpack.c.l.b16 %v605
        %v686 = vunpack.c.l.b16 %v606
        %v687 = vunpack.c.l.b16 %v607
        %v688 = vunpack.c.l.b16 %v608
        %v689 = vunpack.c.l.b16 %v609
        %v690 = vpack.c.b16 %v675, %v674
        %v691 = vpack.c.b16 %v677, %v676
        %v692 = vpack.c.b16 %v679, %v678
        %v693 = vpack.c.b16 %v681, %v680
        %v694 = vpack.c.b16 %v683, %v682
        %v695 = vpack.c.b16 %v685, %v684
        %v696 = vpack.c.b16 %v687, %v686
        %v697 = vpack.c.b16 %v689, %v688
        %706 = vmatpush.bf16.msra.mxu0 %v697
        %707 = vmatpush.bf16.msra.mxu0 %v696
        %708 = vmatpush.bf16.msra.mxu0 %v695
        %709 = vmatpush.bf16.msra.mxu0 %v694
        %710 = vmatpush.bf16.msra.mxu0 %v693
        %711 = vmatpush.bf16.msra.mxu0 %v692
        %712 = vmatpush.bf16.msra.mxu0 %v691
        %713 = vmatpush.bf16.msra.mxu0 %v690
        %714 = vmatmul.bf16.gmra.mxu0 %v642
        %v715 = vpop.f32.mrf.mxu0
        %v716 = vadd.f32 0.0, %v715
        %v717 = vpop.f32.mrf.mxu0
        %v718 = vadd.f32 0.0, %v717
        %719 = vmatmul.bf16.gmra.mxu0 %v643
        %v720 = vpop.f32.mrf.mxu0
        %v721 = vadd.f32 0.0, %v720
        %v722 = vpop.f32.mrf.mxu0
        %v723 = vadd.f32 0.0, %v722
        %724 = vmatmul.bf16.gmra.mxu0 %v644
        %v725 = vpop.f32.mrf.mxu0
        %v726 = vadd.f32 0.0, %v725
        %v727 = vpop.f32.mrf.mxu0
        %v728 = vadd.f32 0.0, %v727
        %729 = vmatmul.bf16.gmra.mxu0 %v645
        %v730 = vpop.f32.mrf.mxu0
        %v731 = vadd.f32 0.0, %v730
        %v732 = vpop.f32.mrf.mxu0
        %v733 = vadd.f32 0.0, %v732
        %734 = vmatmul.bf16.gmra.mxu0 %v646
        %v735 = vpop.f32.mrf.mxu0
        %v736 = vadd.f32 0.0, %v735
        %v737 = vpop.f32.mrf.mxu0
        %v738 = vadd.f32 0.0, %v737
        %739 = vmatmul.bf16.gmra.mxu0 %v647
        %v740 = vpop.f32.mrf.mxu0
        %v741 = vadd.f32 0.0, %v740
        %v742 = vpop.f32.mrf.mxu0
        %v743 = vadd.f32 0.0, %v742
        %744 = vmatmul.bf16.gmra.mxu0 %v648
        %v745 = vpop.f32.mrf.mxu0
        %v746 = vadd.f32 0.0, %v745
        %v747 = vpop.f32.mrf.mxu0
        %v748 = vadd.f32 0.0, %v747
        %749 = vmatmul.bf16.gmra.mxu0 %v649
        %v750 = vpop.f32.mrf.mxu0
        %v751 = vadd.f32 0.0, %v750
        %v752 = vpop.f32.mrf.mxu0
        %v753 = vadd.f32 0.0, %v752
        %754 = vdwg.mxu0
        %v755 = vadd.f32 %v562, %v716
        %v756 = vadd.f32 %v563, %v718
        %v757 = vadd.f32 %v564, %v721
        %v758 = vadd.f32 %v565, %v723
        %v759 = vadd.f32 %v566, %v726
        %v760 = vadd.f32 %v567, %v728
        %v761 = vadd.f32 %v568, %v731
        %v762 = vadd.f32 %v569, %v733
        %v763 = vadd.f32 %v570, %v736
        %v764 = vadd.f32 %v571, %v738
        %v765 = vadd.f32 %v572, %v741
        %v766 = vadd.f32 %v573, %v743
        %v767 = vadd.f32 %v574, %v746
        %v768 = vadd.f32 %v575, %v748
        %v769 = vadd.f32 %v576, %v751
        %v770 = vadd.f32 %v577, %v753
        %771 = vst [vmem:[#allocation2] sm:$0xff] %v755
        %772 = vst [vmem:[#allocation2 + $0x8] sm:$0xff] %v756
        %773 = vst [vmem:[#allocation2 + $0x10] sm:$0xff] %v757
        %774 = vst [vmem:[#allocation2 + $0x18] sm:$0xff] %v758
        %775 = vst [vmem:[#allocation2 + $0x20] sm:$0xff] %v759
        %776 = vst [vmem:[#allocation2 + $0x28] sm:$0xff] %v760
        %777 = vst [vmem:[#allocation2 + $0x30] sm:$0xff] %v761
        %778 = vst [vmem:[#allocation2 + $0x38] sm:$0xff] %v762
        %779 = vst [vmem:[#allocation2 + $0x40] sm:$0xff] %v763
        %780 = vst [vmem:[#allocation2 + $0x48] sm:$0xff] %v764
        %781 = vst [vmem:[#allocation2 + $0x50] sm:$0xff] %v765
        %782 = vst [vmem:[#allocation2 + $0x58] sm:$0xff] %v766
        %783 = vst [vmem:[#allocation2 + $0x60] sm:$0xff] %v767
        %784 = vst [vmem:[#allocation2 + $0x68] sm:$0xff] %v768
        %785 = vst [vmem:[#allocation2 + $0x70] sm:$0xff] %v769
        %786 = vst [vmem:[#allocation2 + $0x78] sm:$0xff] %v770
        %p787 = scmp.eq.s32.totalorder %s21, 1
        // Predicated region
        $region86: #{tagraph_forward.4} parent=76 // pred_check
          %p788 = pneg %p787
        $region87: #{tagraph_forward.4} parent=76 // pred_check_branch
          %790 = sbr.rel (%p788) target = $region89
        $region88: #{tagraph_forward.4} parent=76 // pred_region
          %v791 = vld [vmem:[#allocation2] sm:$0xff]
          %v792 = vld [vmem:[#allocation2 + $0x8] sm:$0xff]
          %v793 = vld [vmem:[#allocation2 + $0x10] sm:$0xff]
          %v794 = vld [vmem:[#allocation2 + $0x18] sm:$0xff]
          %v795 = vld [vmem:[#allocation2 + $0x20] sm:$0xff]
          %v796 = vld [vmem:[#allocation2 + $0x28] sm:$0xff]
          %v797 = vld [vmem:[#allocation2 + $0x30] sm:$0xff]
          %v798 = vld [vmem:[#allocation2 + $0x38] sm:$0xff]
          %v799 = vld [vmem:[#allocation2 + $0x40] sm:$0xff]
          %v800 = vld [vmem:[#allocation2 + $0x48] sm:$0xff]
          %v801 = vld [vmem:[#allocation2 + $0x50] sm:$0xff]
          %v802 = vld [vmem:[#allocation2 + $0x58] sm:$0xff]
          %v803 = vld [vmem:[#allocation2 + $0x60] sm:$0xff]
          %v804 = vld [vmem:[#allocation2 + $0x68] sm:$0xff]
          %v805 = vld [vmem:[#allocation2 + $0x70] sm:$0xff]
          %v806 = vld [vmem:[#allocation2 + $0x78] sm:$0xff]
          %v807 = vpack.c.bf16 %v791, %v791
          %v808 = vpack.c.bf16 %v792, %v792
          %v809 = vpack.c.bf16 %v793, %v793
          %v810 = vpack.c.bf16 %v794, %v794
          %v811 = vpack.c.bf16 %v795, %v795
          %v812 = vpack.c.bf16 %v796, %v796
          %v813 = vpack.c.bf16 %v797, %v797
          %v814 = vpack.c.bf16 %v798, %v798
          %v815 = vpack.c.bf16 %v799, %v799
          %v816 = vpack.c.bf16 %v800, %v800
          %v817 = vpack.c.bf16 %v801, %v801
          %v818 = vpack.c.bf16 %v802, %v802
          %v819 = vpack.c.bf16 %v803, %v803
          %v820 = vpack.c.bf16 %v804, %v804
          %v821 = vpack.c.bf16 %v805, %v805
          %v822 = vpack.c.bf16 %v806, %v806
          %823 = vst [vmem:[%s389] sm:$0xf] %v807
          %824 = vst [vmem:[%s389 + $0x4] sm:$0xf] %v808
          %825 = vst [vmem:[%s389 + $0x8] sm:$0xf] %v809
          %826 = vst [vmem:[%s389 + $0xc] sm:$0xf] %v810
          %827 = vst [vmem:[%s389 + $0x10] sm:$0xf] %v811
          %828 = vst [vmem:[%s389 + $0x14] sm:$0xf] %v812
          %829 = vst [vmem:[%s389 + $0x18] sm:$0xf] %v813
          %830 = vst [vmem:[%s389 + $0x1c] sm:$0xf] %v814
          %831 = vst [vmem:[%s389 + $0x20] sm:$0xf] %v815
          %832 = vst [vmem:[%s389 + $0x24] sm:$0xf] %v816
          %833 = vst [vmem:[%s389 + $0x28] sm:$0xf] %v817
          %834 = vst [vmem:[%s389 + $0x2c] sm:$0xf] %v818
          %835 = vst [vmem:[%s389 + $0x30] sm:$0xf] %v819
          %836 = vst [vmem:[%s389 + $0x34] sm:$0xf] %v820
          %837 = vst [vmem:[%s389 + $0x38] sm:$0xf] %v821
          %838 = vst [vmem:[%s389 + $0x3c] sm:$0xf] %v822
        $region89: #{tagraph_forward.4} parent=76 // pred_fallthru
          _
        %s839 = smul.u32 16, %s20
        %p840 = scmp.lt.s32.totalorder %s839, 31
        %s841 = scalar_select %p840, %s839, 31
        %s842 = smul.addr %s841, 4
        %s843 = scalar_lea.vmem %s5, %s842
        // Predicated region
        $region90: #{tagraph_forward.4} parent=76 // pred_check
          %p844 = pneg %p168
        $region91: #{tagraph_forward.4} parent=76 // pred_check_branch
          %846 = sbr.rel (%p844) target = $region93
        $region92: #{tagraph_forward.4} parent=76 // pred_region
          %s847 = smul.u32 16, %s20
        $region93: #{tagraph_forward.4} parent=76 // pred_fallthru
          _
      $region77: #{tagraph_forward.4} parent=5 // pred_fallthru
        _
      %p848 = scmp.le.s32.totalorder 2, %s11
      // Predicated region
      $region94: #{tagraph_forward.4} parent=5 // pred_check
        %p849 = pneg %p848
      $region95: #{tagraph_forward.4} parent=5 // pred_check_branch
        %851 = sbr.rel (%p849) target = $region97
      $region96: #{tagraph_forward.4} parent=5 // pred_region
        %s852 = ssub.s32 %s11, 2
        // Predicated region
        $region98: #{tagraph_forward.4} parent=96 // pred_check
          %p853 = pneg %p174
        $region99: #{tagraph_forward.4} parent=96 // pred_check_branch
          %855 = sbr.rel (%p853) target = $region101
        $region100: #{tagraph_forward.4} parent=96 // pred_region
          %s856 = smul.u32 16, %s22
          %p857 = scmp.lt.s32.totalorder %s856, 31
          %s858 = scalar_select %p857, %s856, 31
          %s859 = smul.addr %s858, 4
          %s860 = scalar_lea.vmem %s5, %s859
        $region101: #{tagraph_forward.4} parent=96 // pred_fallthru
          _
      $region97: #{tagraph_forward.4} parent=5 // pred_fallthru
        _
    $region6: #{tagraph_forward.4} parent=1 // loop_footer
      %s15 = sadd.s32 1, %s11
    $region7: #{tagraph_forward.4} parent=1 // loop_footer_branch
      %10 = sbr.rel target = $region3
    $region8: #{tagraph_forward.4} parent=1 // loop_exit
      _

</llo_original>
